<compile_context>
chip_gen: v6e
topology: v6e:2x2x1
jax: 0.10.0
libtpu: 0.0.40
codegen_flags: <defaults>
</compile_context>

<pallas_src>
import functools

import jax
import jax.numpy as jnp
from jax import lax
from jax.experimental import pallas as pl
from jax.experimental.pallas import tpu as pltpu

LN_EPS = 1e-5  # torch nn.LayerNorm default


# ------------------------- in-kernel helpers -------------------------------
def _layernorm(x, gamma, beta):
    # LayerNorm subclass always computes in float32 and casts back.
    xf = x.astype(jnp.float32)
    mu = jnp.mean(xf, axis=-1, keepdims=True)
    var = jnp.mean((xf - mu) ** 2, axis=-1, keepdims=True)
    return ((xf - mu) * lax.rsqrt(var + LN_EPS)) * gamma + beta


# ------------------------- fused ViT kernel --------------------------------
def _vit_fused_kernel(num_heads,
                      patches_ref, pw_ref, posb_ref,
                      ln1g_ref, ln1b_ref,
                      wq_ref, bq_ref, wk_ref, bk_ref, wv_ref, bv_ref,
                      wo_ref, bo_ref,
                      ln2g_ref, ln2b_ref,
                      w1_ref, b1_ref, w2_ref, b2_ref,
                      o_ref):
    layer = pl.program_id(1)
    _, L, D = o_ref.shape
    H = num_heads
    C = D // H

    # ---- layer-0 prologue: patch embed + cls token + pos embed (fused) ----
    # patches row 0 is all-zero (stands in for the cls token); posb already
    # contains cls+pos[0] for row 0 and pos[1:]+patch_bias for the rest.
    @pl.when(layer == 0)
    def _embed():
        o_ref[0] = jnp.dot(patches_ref[0], pw_ref[...],
                           preferred_element_type=jnp.float32) + posb_ref[...]

    x = o_ref[0]                                          # (L, D) f32 residual

    # ---- attention branch (pre-norm); 1/sqrt(C) folded into wq/bq ----------
    xn = _layernorm(x, ln1g_ref[0], ln1b_ref[0]).astype(jnp.bfloat16)
    q = (jnp.dot(xn, wq_ref[0], preferred_element_type=jnp.float32)
         + bq_ref[0]).astype(jnp.bfloat16)
    k = (jnp.dot(xn, wk_ref[0], preferred_element_type=jnp.float32)
         + bk_ref[0]).astype(jnp.bfloat16)
    v = (jnp.dot(xn, wv_ref[0], preferred_element_type=jnp.float32)
         + bv_ref[0]).astype(jnp.bfloat16)

    qk_dims = (((1,), (1,)), ((), ()))        # contract feature axis, no k.T
    head_outs = []
    for h in range(H):                        # static unroll over heads
        qh = q[:, h * C:(h + 1) * C]
        kh = k[:, h * C:(h + 1) * C]
        vh = v[:, h * C:(h + 1) * C]
        aff = lax.dot_general(qh, kh, qk_dims,
                              preferred_element_type=jnp.float32)   # (L, L)
        aff = aff - jnp.max(aff, axis=-1, keepdims=True)            # softmax (keys)
        p = jnp.exp(aff)
        p = p * pl.reciprocal(jnp.sum(p, axis=-1, keepdims=True), approx=True)
        head_outs.append(jnp.dot(p.astype(jnp.bfloat16), vh,
                                 preferred_element_type=jnp.float32))
    mix = jnp.concatenate(head_outs, axis=-1).astype(jnp.bfloat16)  # (L, D)
    attn_out = jnp.dot(mix, wo_ref[0],
                       preferred_element_type=jnp.float32) + bo_ref[0]
    x = x + attn_out

    # ---- MLP branch (pre-norm), QuickGELU, dropout = 0 ---------------------
    xn2 = _layernorm(x, ln2g_ref[0], ln2b_ref[0]).astype(jnp.bfloat16)
    h1 = jnp.dot(xn2, w1_ref[0], preferred_element_type=jnp.float32) + b1_ref[0]
    h1 = (h1 * jax.nn.sigmoid(1.702 * h1)).astype(jnp.bfloat16)     # QuickGELU in f32
    h2 = jnp.dot(h1, w2_ref[0], preferred_element_type=jnp.float32) + b2_ref[0]

    o_ref[0] = x + h2


# ------------------------- full model wrapper -------------------------------
@functools.partial(jax.jit, static_argnames=("patch_size", "num_heads"))
def vision_transformer_2d(x, params, patch_size, num_heads):
    B, Cin, Himg, Wimg = x.shape
    pH, pW = patch_size
    nH, nW = Himg // pH, Wimg // pW
    P = nH * nW
    K = Cin * pH * pW
    D = params["patch_w"].shape[1]
    L = P + 1
    nL = len(params["layers"])
    head_dim = D // num_heads

    # --- glue: torch view/permute/flatten patch extraction (pure reshape) ---
    patches = (x.reshape(B, Cin, nH, pH, nW, pW)
                 .transpose(0, 2, 4, 1, 3, 5)
                 .reshape(B, P, K))
    # zero patch row in slot 0 stands in for the cls token.
    patches_aug = jnp.concatenate(
        [jnp.zeros((B, 1, K), patches.dtype), patches], axis=1
    ).astype(jnp.bfloat16)                                           # (B, L, K)

    pos = params["pos_embed"].astype(jnp.float32)                    # (L, D)
    add_tbl = jnp.concatenate(
        [params["cls_token"].reshape(1, D) + pos[0:1, :],            # cls row
         pos[1:, :] + params["patch_b"]], axis=0)                    # patch rows
    patch_w = params["patch_w"].astype(jnp.bfloat16)                 # (K, D)

    # --- stack per-layer params; fold qk scale; cast weight mats to bf16 ----
    scale = 1.0 / (head_dim ** 0.5)

    def stack(name):
        return jnp.stack([lp[name] for lp in params["layers"]], axis=0)

    wq = (stack("wq") * scale).astype(jnp.bfloat16)
    bq = stack("bq") * scale
    wk = stack("wk").astype(jnp.bfloat16)
    wv = stack("wv").astype(jnp.bfloat16)
    wo = stack("wo").astype(jnp.bfloat16)
    w1 = stack("w1").astype(jnp.bfloat16)
    w2 = stack("w2").astype(jnp.bfloat16)
    bk, bv, bo = stack("bk"), stack("bv"), stack("bo")
    b1, b2 = stack("b1"), stack("b2")
    ln1g, ln1b = stack("ln1_g"), stack("ln1_b")
    ln2g, ln2b = stack("ln2_g"), stack("ln2_b")

    def const_spec(arr):
        return pl.BlockSpec(arr.shape,
                            lambda b, l, nd=arr.ndim: (0,) * nd)

    def batch_spec(arr):
        return pl.BlockSpec((1,) + arr.shape[1:],
                            lambda b, l, nd=arr.ndim: (b,) + (0,) * (nd - 1))

    def layer_spec(arr):
        return pl.BlockSpec((1,) + arr.shape[1:],
                            lambda b, l, nd=arr.ndim: (l,) + (0,) * (nd - 1))

    args = [patches_aug, patch_w, add_tbl,
            ln1g, ln1b, wq, bq, wk, bk, wv, bv, wo, bo,
            ln2g, ln2b, w1, b1, w2, b2]
    in_specs = [batch_spec(patches_aug), const_spec(patch_w), const_spec(add_tbl)]
    in_specs += [layer_spec(a) for a in args[3:]]

    kern = functools.partial(_vit_fused_kernel, num_heads)
    return pl.pallas_call(
        kern,
        out_shape=jax.ShapeDtypeStruct((B, L, D), jnp.float32),
        grid=(B, nL),
        in_specs=in_specs,
        out_specs=pl.BlockSpec((1, L, D), lambda b, l: (b, 0, 0)),
        compiler_params=pltpu.CompilerParams(
            dimension_semantics=("parallel", "arbitrary"),
            vmem_limit_bytes=64 * 1024 * 1024),
    )(*args)


# ------------------------- deterministic parameter init ---------------------
def _xavier_uniform(key, fan_in, fan_out):
    a = (6.0 / (fan_in + fan_out)) ** 0.5
    return jax.random.uniform(key, (fan_in, fan_out), jnp.float32, -a, a)


def init_params(key, feature_dim, patch_size, in_channels, num_heads,
                num_layers, mlp_factor, num_patches_plus_1):
    patch_dim = patch_size[0] * patch_size[1] * in_channels
    mlp_dim = int(round(mlp_factor * feature_dim))
    keys = jax.random.split(key, 4 + num_layers)

    params = {
        "patch_w": _xavier_uniform(keys[0], patch_dim, feature_dim),
        "patch_b": jnp.zeros((1, feature_dim), jnp.float32),
        "cls_token": 0.02 * jax.random.normal(keys[1], (feature_dim,), jnp.float32),
        "pos_embed": 0.02 * jax.random.normal(keys[2], (num_patches_plus_1, feature_dim),
                                              jnp.float32),
        "layers": [],
    }
    for li in range(num_layers):
        lk = jax.random.split(keys[4 + li], 8)
        layer = {
            "ln1_g": jnp.ones((1, feature_dim), jnp.float32),
            "ln1_b": jnp.zeros((1, feature_dim), jnp.float32),
            # weights stored as (in, out) so the kernel does x @ W + b,
            # matching torch Linear's x @ W.T + b
            "wq": _xavier_uniform(lk[0], feature_dim, feature_dim),
            "bq": jnp.zeros((1, feature_dim), jnp.float32),
            "wk": _xavier_uniform(lk[1], feature_dim, feature_dim),
            "bk": jnp.zeros((1, feature_dim), jnp.float32),
            "wv": _xavier_uniform(lk[2], feature_dim, feature_dim),
            "bv": jnp.zeros((1, feature_dim), jnp.float32),
            "wo": _xavier_uniform(lk[3], feature_dim, feature_dim),
            "bo": jnp.zeros((1, feature_dim), jnp.float32),
            "ln2_g": jnp.ones((1, feature_dim), jnp.float32),
            "ln2_b": jnp.zeros((1, feature_dim), jnp.float32),
            "w1": _xavier_uniform(lk[4], feature_dim, mlp_dim),
            "b1": 1e-6 * jax.random.normal(lk[5], (1, mlp_dim), jnp.float32),
            "w2": _xavier_uniform(lk[6], mlp_dim, feature_dim),
            "b2": 1e-6 * jax.random.normal(lk[7], (1, feature_dim), jnp.float32),
        }
        params["layers"].append(layer)
    return params


# ------------------------- main ---------------------------------------------
if __name__ == "__main__":
    # Small config consistent with the module:
    #   input (B, C, H, W) = (2, 3, 16, 16), patch (8, 8) -> 4 patches + cls = 5 tokens
    #   feature_dim = 32, num_heads = 4, num_layers = 2, mlp_factor = 4.0
    B, C, H, W = 2, 3, 16, 16
    patch_size = (8, 8)
    feature_dim = 32
    num_heads = 4
    num_layers = 2
    mlp_factor = 4.0
    num_patches = (H // patch_size[0]) * (W // patch_size[1]) + 1  # +1 cls token

    key = jax.random.PRNGKey(0)
    k_x, k_p = jax.random.split(key)
    x = jax.random.normal(k_x, (B, C, H, W), jnp.float32)

    params = init_params(k_p, feature_dim, patch_size, C, num_heads,
                         num_layers, mlp_factor, num_patches)

    out = vision_transformer_2d(x, params, patch_size, num_heads)
    out = jax.block_until_ready(out)
    assert out.shape == (B, num_patches, feature_dim)
    print("KERNEL_OK")
</pallas_src>

<mosaic_0001>
module attributes {stable_mosaic.version = 11 : i64} {
  func.func @_vit_fused_kernel(%arg0: i32, %arg1: i32, %arg2: memref<1x5x192xbf16, #tpu.memory_space<vmem>>, %arg3: memref<192x32xbf16, #tpu.memory_space<vmem>>, %arg4: memref<5x32xf32, #tpu.memory_space<vmem>>, %arg5: memref<1x1x32xf32, #tpu.memory_space<vmem>>, %arg6: memref<1x1x32xf32, #tpu.memory_space<vmem>>, %arg7: memref<1x32x32xbf16, #tpu.memory_space<vmem>>, %arg8: memref<1x1x32xf32, #tpu.memory_space<vmem>>, %arg9: memref<1x32x32xbf16, #tpu.memory_space<vmem>>, %arg10: memref<1x1x32xf32, #tpu.memory_space<vmem>>, %arg11: memref<1x32x32xbf16, #tpu.memory_space<vmem>>, %arg12: memref<1x1x32xf32, #tpu.memory_space<vmem>>, %arg13: memref<1x32x32xbf16, #tpu.memory_space<vmem>>, %arg14: memref<1x1x32xf32, #tpu.memory_space<vmem>>, %arg15: memref<1x1x32xf32, #tpu.memory_space<vmem>>, %arg16: memref<1x1x32xf32, #tpu.memory_space<vmem>>, %arg17: memref<1x32x128xbf16, #tpu.memory_space<vmem>>, %arg18: memref<1x1x128xf32, #tpu.memory_space<vmem>>, %arg19: memref<1x128x32xbf16, #tpu.memory_space<vmem>>, %arg20: memref<1x1x32xf32, #tpu.memory_space<vmem>>, %arg21: memref<1x5x32xf32, #tpu.memory_space<vmem>>) attributes {dimension_semantics = [#tpu.dimension_semantics<parallel>, #tpu.dimension_semantics<arbitrary>], iteration_bounds = array<i64: 2, 2>, scalar_prefetch = 0 : i64, scratch_operands = 0 : i64, tpu.core_type = #tpu.core_type<tc>, window_params = [{transform_indices = @transform_0, window_bounds = array<i64: 1, 5, 192>}, {pipeline_mode = #tpu.pipeline_mode<synchronous>, transform_indices = @transform_1, window_bounds = array<i64: 192, 32>}, {pipeline_mode = #tpu.pipeline_mode<synchronous>, transform_indices = @transform_2, window_bounds = array<i64: 5, 32>}, {transform_indices = @transform_3, window_bounds = array<i64: 1, 1, 32>}, {transform_indices = @transform_4, window_bounds = array<i64: 1, 1, 32>}, {transform_indices = @transform_5, window_bounds = array<i64: 1, 32, 32>}, {transform_indices = @transform_6, window_bounds = array<i64: 1, 1, 32>}, {transform_indices = @transform_7, window_bounds = array<i64: 1, 32, 32>}, {transform_indices = @transform_8, window_bounds = array<i64: 1, 1, 32>}, {transform_indices = @transform_9, window_bounds = array<i64: 1, 32, 32>}, {transform_indices = @transform_10, window_bounds = array<i64: 1, 1, 32>}, {transform_indices = @transform_11, window_bounds = array<i64: 1, 32, 32>}, {transform_indices = @transform_12, window_bounds = array<i64: 1, 1, 32>}, {transform_indices = @transform_13, window_bounds = array<i64: 1, 1, 32>}, {transform_indices = @transform_14, window_bounds = array<i64: 1, 1, 32>}, {transform_indices = @transform_15, window_bounds = array<i64: 1, 32, 128>}, {transform_indices = @transform_16, window_bounds = array<i64: 1, 1, 128>}, {transform_indices = @transform_17, window_bounds = array<i64: 1, 128, 32>}, {transform_indices = @transform_18, window_bounds = array<i64: 1, 1, 32>}, {transform_indices = @transform_19, window_bounds = array<i64: 1, 5, 32>}]} {
    %c0_i32 = arith.constant 0 : i32
    %0 = arith.cmpi eq, %arg1, %c0_i32 : i32
    %1 = arith.extui %0 : i1 to i32
    %c0_i32_0 = arith.constant 0 : i32
    %2 = arith.cmpi ne, %1, %c0_i32_0 : i32
    scf.if %2 {
      %c0_87 = arith.constant 0 : index
      %c0_88 = arith.constant 0 : index
      %c0_89 = arith.constant 0 : index
      %184 = vector.load %arg2[%c0_87, %c0_88, %c0_89] : memref<1x5x192xbf16, #tpu.memory_space<vmem>>, vector<1x5x192xbf16>
      %185 = vector.shape_cast %184 : vector<1x5x192xbf16> to vector<5x192xbf16>
      %c0_90 = arith.constant 0 : index
      %c0_91 = arith.constant 0 : index
      %186 = vector.load %arg3[%c0_90, %c0_91] : memref<192x32xbf16, #tpu.memory_space<vmem>>, vector<192x32xbf16>
      %cst_92 = arith.constant dense<0.000000e+00> : vector<5x32xf32>
      %187 = tpu.matmul %185, %186, %cst_92 {dimension_numbers = #tpu.dot_dimension_numbers<[1], [0], [0], [1], [0, 0, 1, 1], [], []>} : vector<5x192xbf16>, vector<192x32xbf16>, vector<5x32xf32> -> vector<5x32xf32>
      %c0_93 = arith.constant 0 : index
      %c0_94 = arith.constant 0 : index
      %188 = vector.load %arg4[%c0_93, %c0_94] : memref<5x32xf32, #tpu.memory_space<vmem>>, vector<5x32xf32>
      %189 = arith.addf %187, %188 : vector<5x32xf32>
      %c0_95 = arith.constant 0 : index
      %c0_96 = arith.constant 0 : index
      %c0_97 = arith.constant 0 : index
      %190 = vector.load %arg21[%c0_95, %c0_96, %c0_97] : memref<1x5x32xf32, #tpu.memory_space<vmem>>, vector<1x5x32xf32>
      %191 = vector.shape_cast %190 : vector<1x5x32xf32> to vector<5x32xf32>
      %192 = vector.shape_cast %189 : vector<5x32xf32> to vector<1x5x32xf32>
      tpu.vector_store %arg21[%c0_95, %c0_96, %c0_97], %192 {strides = array<i32>} : memref<1x5x32xf32, #tpu.memory_space<vmem>>, vector<1x5x32xf32>,
    } else {
    }
    %c0 = arith.constant 0 : index
    %c0_1 = arith.constant 0 : index
    %c0_2 = arith.constant 0 : index
    %3 = vector.load %arg21[%c0, %c0_1, %c0_2] : memref<1x5x32xf32, #tpu.memory_space<vmem>>, vector<1x5x32xf32>
    %4 = vector.shape_cast %3 : vector<1x5x32xf32> to vector<5x32xf32>
    %c0_3 = arith.constant 0 : index
    %c0_4 = arith.constant 0 : index
    %c0_5 = arith.constant 0 : index
    %5 = vector.load %arg5[%c0_3, %c0_4, %c0_5] : memref<1x1x32xf32, #tpu.memory_space<vmem>>, vector<1x1x32xf32>
    %6 = vector.shape_cast %5 : vector<1x1x32xf32> to vector<1x32xf32>
    %c0_6 = arith.constant 0 : index
    %c0_7 = arith.constant 0 : index
    %c0_8 = arith.constant 0 : index
    %7 = vector.load %arg6[%c0_6, %c0_7, %c0_8] : memref<1x1x32xf32, #tpu.memory_space<vmem>>, vector<1x1x32xf32>
    %8 = vector.shape_cast %7 : vector<1x1x32xf32> to vector<1x32xf32>
    %cst = arith.constant dense<0.000000e+00> : vector<5xf32>
    %9 = vector.multi_reduction <add>, %4, %cst [1] : vector<5x32xf32> to vector<5xf32>
    %10 = vector.shape_cast %9 : vector<5xf32> to vector<5x1xf32>
    %cst_9 = arith.constant 3.200000e+01 : f32
    %11 = vector.broadcast %cst_9 : f32 to vector<5x1xf32>
    %12 = arith.divf %10, %11 : vector<5x1xf32>
    %13 = vector.broadcast %12 : vector<5x1xf32> to vector<5x32xf32>
    %14 = arith.subf %4, %13 : vector<5x32xf32>
    %15 = arith.mulf %14, %14 : vector<5x32xf32>
    %cst_10 = arith.constant dense<0.000000e+00> : vector<5xf32>
    %16 = vector.multi_reduction <add>, %15, %cst_10 [1] : vector<5x32xf32> to vector<5xf32>
    %17 = vector.shape_cast %16 : vector<5xf32> to vector<5x1xf32>
    %cst_11 = arith.constant 3.200000e+01 : f32
    %18 = vector.broadcast %cst_11 : f32 to vector<5x1xf32>
    %19 = arith.divf %17, %18 : vector<5x1xf32>
    %20 = vector.broadcast %12 : vector<5x1xf32> to vector<5x32xf32>
    %21 = arith.subf %4, %20 : vector<5x32xf32>
    %cst_12 = arith.constant 9.99999974E-6 : f32
    %22 = vector.broadcast %cst_12 : f32 to vector<5x1xf32>
    %23 = arith.addf %19, %22 : vector<5x1xf32>
    %24 = math.rsqrt %23 : vector<5x1xf32>
    %25 = vector.broadcast %24 : vector<5x1xf32> to vector<5x32xf32>
    %26 = arith.mulf %21, %25 : vector<5x32xf32>
    %27 = vector.broadcast %6 : vector<1x32xf32> to vector<5x32xf32>
    %28 = arith.mulf %26, %27 : vector<5x32xf32>
    %29 = vector.broadcast %8 : vector<1x32xf32> to vector<5x32xf32>
    %30 = arith.addf %28, %29 : vector<5x32xf32>
    %31 = arith.truncf %30 : vector<5x32xf32> to vector<5x32xbf16>
    %c0_13 = arith.constant 0 : index
    %c0_14 = arith.constant 0 : index
    %c0_15 = arith.constant 0 : index
    %32 = vector.load %arg7[%c0_13, %c0_14, %c0_15] : memref<1x32x32xbf16, #tpu.memory_space<vmem>>, vector<1x32x32xbf16>
    %33 = vector.shape_cast %32 : vector<1x32x32xbf16> to vector<32x32xbf16>
    %cst_16 = arith.constant dense<0.000000e+00> : vector<5x32xf32>
    %34 = tpu.matmul %31, %33, %cst_16 {dimension_numbers = #tpu.dot_dimension_numbers<[1], [0], [0], [1], [0, 0, 1, 1], [], []>} : vector<5x32xbf16>, vector<32x32xbf16>, vector<5x32xf32> -> vector<5x32xf32>
    %c0_17 = arith.constant 0 : index
    %c0_18 = arith.constant 0 : index
    %c0_19 = arith.constant 0 : index
    %35 = vector.load %arg8[%c0_17, %c0_18, %c0_19] : memref<1x1x32xf32, #tpu.memory_space<vmem>>, vector<1x1x32xf32>
    %36 = vector.shape_cast %35 : vector<1x1x32xf32> to vector<1x32xf32>
    %37 = vector.broadcast %36 : vector<1x32xf32> to vector<5x32xf32>
    %38 = arith.addf %34, %37 : vector<5x32xf32>
    %39 = arith.truncf %38 : vector<5x32xf32> to vector<5x32xbf16>
    %c0_20 = arith.constant 0 : index
    %c0_21 = arith.constant 0 : index
    %c0_22 = arith.constant 0 : index
    %40 = vector.load %arg9[%c0_20, %c0_21, %c0_22] : memref<1x32x32xbf16, #tpu.memory_space<vmem>>, vector<1x32x32xbf16>
    %41 = vector.shape_cast %40 : vector<1x32x32xbf16> to vector<32x32xbf16>
    %cst_23 = arith.constant dense<0.000000e+00> : vector<5x32xf32>
    %42 = tpu.matmul %31, %41, %cst_23 {dimension_numbers = #tpu.dot_dimension_numbers<[1], [0], [0], [1], [0, 0, 1, 1], [], []>} : vector<5x32xbf16>, vector<32x32xbf16>, vector<5x32xf32> -> vector<5x32xf32>
    %c0_24 = arith.constant 0 : index
    %c0_25 = arith.constant 0 : index
    %c0_26 = arith.constant 0 : index
    %43 = vector.load %arg10[%c0_24, %c0_25, %c0_26] : memref<1x1x32xf32, #tpu.memory_space<vmem>>, vector<1x1x32xf32>
    %44 = vector.shape_cast %43 : vector<1x1x32xf32> to vector<1x32xf32>
    %45 = vector.broadcast %44 : vector<1x32xf32> to vector<5x32xf32>
    %46 = arith.addf %42, %45 : vector<5x32xf32>
    %47 = arith.truncf %46 : vector<5x32xf32> to vector<5x32xbf16>
    %c0_27 = arith.constant 0 : index
    %c0_28 = arith.constant 0 : index
    %c0_29 = arith.constant 0 : index
    %48 = vector.load %arg11[%c0_27, %c0_28, %c0_29] : memref<1x32x32xbf16, #tpu.memory_space<vmem>>, vector<1x32x32xbf16>
    %49 = vector.shape_cast %48 : vector<1x32x32xbf16> to vector<32x32xbf16>
    %cst_30 = arith.constant dense<0.000000e+00> : vector<5x32xf32>
    %50 = tpu.matmul %31, %49, %cst_30 {dimension_numbers = #tpu.dot_dimension_numbers<[1], [0], [0], [1], [0, 0, 1, 1], [], []>} : vector<5x32xbf16>, vector<32x32xbf16>, vector<5x32xf32> -> vector<5x32xf32>
    %c0_31 = arith.constant 0 : index
    %c0_32 = arith.constant 0 : index
    %c0_33 = arith.constant 0 : index
    %51 = vector.load %arg12[%c0_31, %c0_32, %c0_33] : memref<1x1x32xf32, #tpu.memory_space<vmem>>, vector<1x1x32xf32>
    %52 = vector.shape_cast %51 : vector<1x1x32xf32> to vector<1x32xf32>
    %53 = vector.broadcast %52 : vector<1x32xf32> to vector<5x32xf32>
    %54 = arith.addf %50, %53 : vector<5x32xf32>
    %55 = arith.truncf %54 : vector<5x32xf32> to vector<5x32xbf16>
    %56 = vector.extract_strided_slice %39 {offsets = [0, 0], sizes = [5, 8], strides = [1, 1]} : vector<5x32xbf16> to vector<5x8xbf16>
    %57 = vector.extract_strided_slice %47 {offsets = [0, 0], sizes = [5, 8], strides = [1, 1]} : vector<5x32xbf16> to vector<5x8xbf16>
    %58 = vector.extract_strided_slice %55 {offsets = [0, 0], sizes = [5, 8], strides = [1, 1]} : vector<5x32xbf16> to vector<5x8xbf16>
    %cst_34 = arith.constant dense<0.000000e+00> : vector<5x5xf32>
    %59 = tpu.matmul %56, %57, %cst_34 {dimension_numbers = #tpu.dot_dimension_numbers<[1], [1], [0], [0], [0, 0, 1, 0], [], []>} : vector<5x8xbf16>, vector<5x8xbf16>, vector<5x5xf32> -> vector<5x5xf32>
    %cst_35 = arith.constant dense<0xFF800000> : vector<5xf32>
    %60 = vector.multi_reduction <maximumf>, %59, %cst_35 [1] : vector<5x5xf32> to vector<5xf32>
    %61 = vector.shape_cast %60 : vector<5xf32> to vector<5x1xf32>
    %62 = vector.broadcast %61 : vector<5x1xf32> to vector<5x5xf32>
    %63 = arith.subf %59, %62 : vector<5x5xf32>
    %64 = math.exp %63 : vector<5x5xf32>
    %cst_36 = arith.constant dense<0.000000e+00> : vector<5xf32>
    %65 = vector.multi_reduction <add>, %64, %cst_36 [1] : vector<5x5xf32> to vector<5xf32>
    %66 = vector.shape_cast %65 : vector<5xf32> to vector<5x1xf32>
    %67 = tpu.reciprocal %66 {approx = true} : vector<5x1xf32> -> vector<5x1xf32>
    %68 = vector.broadcast %67 : vector<5x1xf32> to vector<5x5xf32>
    %69 = arith.mulf %64, %68 : vector<5x5xf32>
    %70 = arith.truncf %69 : vector<5x5xf32> to vector<5x5xbf16>
    %cst_37 = arith.constant dense<0.000000e+00> : vector<5x8xf32>
    %71 = tpu.matmul %70, %58, %cst_37 {dimension_numbers = #tpu.dot_dimension_numbers<[1], [0], [0], [1], [0, 0, 1, 1], [], []>} : vector<5x5xbf16>, vector<5x8xbf16>, vector<5x8xf32> -> vector<5x8xf32>
    %72 = vector.extract_strided_slice %39 {offsets = [0, 8], sizes = [5, 8], strides = [1, 1]} : vector<5x32xbf16> to vector<5x8xbf16>
    %73 = vector.extract_strided_slice %47 {offsets = [0, 8], sizes = [5, 8], strides = [1, 1]} : vector<5x32xbf16> to vector<5x8xbf16>
    %74 = vector.extract_strided_slice %55 {offsets = [0, 8], sizes = [5, 8], strides = [1, 1]} : vector<5x32xbf16> to vector<5x8xbf16>
    %cst_38 = arith.constant dense<0.000000e+00> : vector<5x5xf32>
    %75 = tpu.matmul %72, %73, %cst_38 {dimension_numbers = #tpu.dot_dimension_numbers<[1], [1], [0], [0], [0, 0, 1, 0], [], []>} : vector<5x8xbf16>, vector<5x8xbf16>, vector<5x5xf32> -> vector<5x5xf32>
    %cst_39 = arith.constant dense<0xFF800000> : vector<5xf32>
    %76 = vector.multi_reduction <maximumf>, %75, %cst_39 [1] : vector<5x5xf32> to vector<5xf32>
    %77 = vector.shape_cast %76 : vector<5xf32> to vector<5x1xf32>
    %78 = vector.broadcast %77 : vector<5x1xf32> to vector<5x5xf32>
    %79 = arith.subf %75, %78 : vector<5x5xf32>
    %80 = math.exp %79 : vector<5x5xf32>
    %cst_40 = arith.constant dense<0.000000e+00> : vector<5xf32>
    %81 = vector.multi_reduction <add>, %80, %cst_40 [1] : vector<5x5xf32> to vector<5xf32>
    %82 = vector.shape_cast %81 : vector<5xf32> to vector<5x1xf32>
    %83 = tpu.reciprocal %82 {approx = true} : vector<5x1xf32> -> vector<5x1xf32>
    %84 = vector.broadcast %83 : vector<5x1xf32> to vector<5x5xf32>
    %85 = arith.mulf %80, %84 : vector<5x5xf32>
    %86 = arith.truncf %85 : vector<5x5xf32> to vector<5x5xbf16>
    %cst_41 = arith.constant dense<0.000000e+00> : vector<5x8xf32>
    %87 = tpu.matmul %86, %74, %cst_41 {dimension_numbers = #tpu.dot_dimension_numbers<[1], [0], [0], [1], [0, 0, 1, 1], [], []>} : vector<5x5xbf16>, vector<5x8xbf16>, vector<5x8xf32> -> vector<5x8xf32>
    %88 = vector.extract_strided_slice %39 {offsets = [0, 16], sizes = [5, 8], strides = [1, 1]} : vector<5x32xbf16> to vector<5x8xbf16>
    %89 = vector.extract_strided_slice %47 {offsets = [0, 16], sizes = [5, 8], strides = [1, 1]} : vector<5x32xbf16> to vector<5x8xbf16>
    %90 = vector.extract_strided_slice %55 {offsets = [0, 16], sizes = [5, 8], strides = [1, 1]} : vector<5x32xbf16> to vector<5x8xbf16>
    %cst_42 = arith.constant dense<0.000000e+00> : vector<5x5xf32>
    %91 = tpu.matmul %88, %89, %cst_42 {dimension_numbers = #tpu.dot_dimension_numbers<[1], [1], [0], [0], [0, 0, 1, 0], [], []>} : vector<5x8xbf16>, vector<5x8xbf16>, vector<5x5xf32> -> vector<5x5xf32>
    %cst_43 = arith.constant dense<0xFF800000> : vector<5xf32>
    %92 = vector.multi_reduction <maximumf>, %91, %cst_43 [1] : vector<5x5xf32> to vector<5xf32>
    %93 = vector.shape_cast %92 : vector<5xf32> to vector<5x1xf32>
    %94 = vector.broadcast %93 : vector<5x1xf32> to vector<5x5xf32>
    %95 = arith.subf %91, %94 : vector<5x5xf32>
    %96 = math.exp %95 : vector<5x5xf32>
    %cst_44 = arith.constant dense<0.000000e+00> : vector<5xf32>
    %97 = vector.multi_reduction <add>, %96, %cst_44 [1] : vector<5x5xf32> to vector<5xf32>
    %98 = vector.shape_cast %97 : vector<5xf32> to vector<5x1xf32>
    %99 = tpu.reciprocal %98 {approx = true} : vector<5x1xf32> -> vector<5x1xf32>
    %100 = vector.broadcast %99 : vector<5x1xf32> to vector<5x5xf32>
    %101 = arith.mulf %96, %100 : vector<5x5xf32>
    %102 = arith.truncf %101 : vector<5x5xf32> to vector<5x5xbf16>
    %cst_45 = arith.constant dense<0.000000e+00> : vector<5x8xf32>
    %103 = tpu.matmul %102, %90, %cst_45 {dimension_numbers = #tpu.dot_dimension_numbers<[1], [0], [0], [1], [0, 0, 1, 1], [], []>} : vector<5x5xbf16>, vector<5x8xbf16>, vector<5x8xf32> -> vector<5x8xf32>
    %104 = vector.extract_strided_slice %39 {offsets = [0, 24], sizes = [5, 8], strides = [1, 1]} : vector<5x32xbf16> to vector<5x8xbf16>
    %105 = vector.extract_strided_slice %47 {offsets = [0, 24], sizes = [5, 8], strides = [1, 1]} : vector<5x32xbf16> to vector<5x8xbf16>
    %106 = vector.extract_strided_slice %55 {offsets = [0, 24], sizes = [5, 8], strides = [1, 1]} : vector<5x32xbf16> to vector<5x8xbf16>
    %cst_46 = arith.constant dense<0.000000e+00> : vector<5x5xf32>
    %107 = tpu.matmul %104, %105, %cst_46 {dimension_numbers = #tpu.dot_dimension_numbers<[1], [1], [0], [0], [0, 0, 1, 0], [], []>} : vector<5x8xbf16>, vector<5x8xbf16>, vector<5x5xf32> -> vector<5x5xf32>
    %cst_47 = arith.constant dense<0xFF800000> : vector<5xf32>
    %108 = vector.multi_reduction <maximumf>, %107, %cst_47 [1] : vector<5x5xf32> to vector<5xf32>
    %109 = vector.shape_cast %108 : vector<5xf32> to vector<5x1xf32>
    %110 = vector.broadcast %109 : vector<5x1xf32> to vector<5x5xf32>
    %111 = arith.subf %107, %110 : vector<5x5xf32>
    %112 = math.exp %111 : vector<5x5xf32>
    %cst_48 = arith.constant dense<0.000000e+00> : vector<5xf32>
    %113 = vector.multi_reduction <add>, %112, %cst_48 [1] : vector<5x5xf32> to vector<5xf32>
    %114 = vector.shape_cast %113 : vector<5xf32> to vector<5x1xf32>
    %115 = tpu.reciprocal %114 {approx = true} : vector<5x1xf32> -> vector<5x1xf32>
    %116 = vector.broadcast %115 : vector<5x1xf32> to vector<5x5xf32>
    %117 = arith.mulf %112, %116 : vector<5x5xf32>
    %118 = arith.truncf %117 : vector<5x5xf32> to vector<5x5xbf16>
    %cst_49 = arith.constant dense<0.000000e+00> : vector<5x8xf32>
    %119 = tpu.matmul %118, %106, %cst_49 {dimension_numbers = #tpu.dot_dimension_numbers<[1], [0], [0], [1], [0, 0, 1, 1], [], []>} : vector<5x5xbf16>, vector<5x8xbf16>, vector<5x8xf32> -> vector<5x8xf32>
    %120 = tpu.concatenate %71, %87, %103, %119 in 1 : vector<5x8xf32>, vector<5x8xf32>, vector<5x8xf32>, vector<5x8xf32> -> vector<5x32xf32>
    %121 = arith.truncf %120 : vector<5x32xf32> to vector<5x32xbf16>
    %c0_50 = arith.constant 0 : index
    %c0_51 = arith.constant 0 : index
    %c0_52 = arith.constant 0 : index
    %122 = vector.load %arg13[%c0_50, %c0_51, %c0_52] : memref<1x32x32xbf16, #tpu.memory_space<vmem>>, vector<1x32x32xbf16>
    %123 = vector.shape_cast %122 : vector<1x32x32xbf16> to vector<32x32xbf16>
    %cst_53 = arith.constant dense<0.000000e+00> : vector<5x32xf32>
    %124 = tpu.matmul %121, %123, %cst_53 {dimension_numbers = #tpu.dot_dimension_numbers<[1], [0], [0], [1], [0, 0, 1, 1], [], []>} : vector<5x32xbf16>, vector<32x32xbf16>, vector<5x32xf32> -> vector<5x32xf32>
    %c0_54 = arith.constant 0 : index
    %c0_55 = arith.constant 0 : index
    %c0_56 = arith.constant 0 : index
    %125 = vector.load %arg14[%c0_54, %c0_55, %c0_56] : memref<1x1x32xf32, #tpu.memory_space<vmem>>, vector<1x1x32xf32>
    %126 = vector.shape_cast %125 : vector<1x1x32xf32> to vector<1x32xf32>
    %127 = vector.broadcast %126 : vector<1x32xf32> to vector<5x32xf32>
    %128 = arith.addf %124, %127 : vector<5x32xf32>
    %129 = arith.addf %4, %128 : vector<5x32xf32>
    %c0_57 = arith.constant 0 : index
    %c0_58 = arith.constant 0 : index
    %c0_59 = arith.constant 0 : index
    %130 = vector.load %arg15[%c0_57, %c0_58, %c0_59] : memref<1x1x32xf32, #tpu.memory_space<vmem>>, vector<1x1x32xf32>
    %131 = vector.shape_cast %130 : vector<1x1x32xf32> to vector<1x32xf32>
    %c0_60 = arith.constant 0 : index
    %c0_61 = arith.constant 0 : index
    %c0_62 = arith.constant 0 : index
    %132 = vector.load %arg16[%c0_60, %c0_61, %c0_62] : memref<1x1x32xf32, #tpu.memory_space<vmem>>, vector<1x1x32xf32>
    %133 = vector.shape_cast %132 : vector<1x1x32xf32> to vector<1x32xf32>
    %cst_63 = arith.constant dense<0.000000e+00> : vector<5xf32>
    %134 = vector.multi_reduction <add>, %129, %cst_63 [1] : vector<5x32xf32> to vector<5xf32>
    %135 = vector.shape_cast %134 : vector<5xf32> to vector<5x1xf32>
    %cst_64 = arith.constant 3.200000e+01 : f32
    %136 = vector.broadcast %cst_64 : f32 to vector<5x1xf32>
    %137 = arith.divf %135, %136 : vector<5x1xf32>
    %138 = vector.broadcast %137 : vector<5x1xf32> to vector<5x32xf32>
    %139 = arith.subf %129, %138 : vector<5x32xf32>
    %140 = arith.mulf %139, %139 : vector<5x32xf32>
    %cst_65 = arith.constant dense<0.000000e+00> : vector<5xf32>
    %141 = vector.multi_reduction <add>, %140, %cst_65 [1] : vector<5x32xf32> to vector<5xf32>
    %142 = vector.shape_cast %141 : vector<5xf32> to vector<5x1xf32>
    %cst_66 = arith.constant 3.200000e+01 : f32
    %143 = vector.broadcast %cst_66 : f32 to vector<5x1xf32>
    %144 = arith.divf %142, %143 : vector<5x1xf32>
    %145 = vector.broadcast %137 : vector<5x1xf32> to vector<5x32xf32>
    %146 = arith.subf %129, %145 : vector<5x32xf32>
    %cst_67 = arith.constant 9.99999974E-6 : f32
    %147 = vector.broadcast %cst_67 : f32 to vector<5x1xf32>
    %148 = arith.addf %144, %147 : vector<5x1xf32>
    %149 = math.rsqrt %148 : vector<5x1xf32>
    %150 = vector.broadcast %149 : vector<5x1xf32> to vector<5x32xf32>
    %151 = arith.mulf %146, %150 : vector<5x32xf32>
    %152 = vector.broadcast %131 : vector<1x32xf32> to vector<5x32xf32>
    %153 = arith.mulf %151, %152 : vector<5x32xf32>
    %154 = vector.broadcast %133 : vector<1x32xf32> to vector<5x32xf32>
    %155 = arith.addf %153, %154 : vector<5x32xf32>
    %156 = arith.truncf %155 : vector<5x32xf32> to vector<5x32xbf16>
    %c0_68 = arith.constant 0 : index
    %c0_69 = arith.constant 0 : index
    %c0_70 = arith.constant 0 : index
    %157 = vector.load %arg17[%c0_68, %c0_69, %c0_70] : memref<1x32x128xbf16, #tpu.memory_space<vmem>>, vector<1x32x128xbf16>
    %158 = vector.shape_cast %157 : vector<1x32x128xbf16> to vector<32x128xbf16>
    %cst_71 = arith.constant dense<0.000000e+00> : vector<5x128xf32>
    %159 = tpu.matmul %156, %158, %cst_71 {dimension_numbers = #tpu.dot_dimension_numbers<[1], [0], [0], [1], [0, 0, 1, 1], [], []>} : vector<5x32xbf16>, vector<32x128xbf16>, vector<5x128xf32> -> vector<5x128xf32>
    %c0_72 = arith.constant 0 : index
    %c0_73 = arith.constant 0 : index
    %c0_74 = arith.constant 0 : index
    %160 = vector.load %arg18[%c0_72, %c0_73, %c0_74] : memref<1x1x128xf32, #tpu.memory_space<vmem>>, vector<1x1x128xf32>
    %161 = vector.shape_cast %160 : vector<1x1x128xf32> to vector<1x128xf32>
    %162 = vector.broadcast %161 : vector<1x128xf32> to vector<5x128xf32>
    %163 = arith.addf %159, %162 : vector<5x128xf32>
    %cst_75 = arith.constant 1.702000e+00 : f32
    %164 = vector.broadcast %cst_75 : f32 to vector<5x128xf32>
    %165 = arith.mulf %164, %163 : vector<5x128xf32>
    %166 = arith.negf %165 : vector<5x128xf32>
    %167 = math.exp %166 : vector<5x128xf32>
    %cst_76 = arith.constant 1.000000e+00 : f32
    %168 = vector.broadcast %cst_76 : f32 to vector<5x128xf32>
    %169 = arith.addf %168, %167 : vector<5x128xf32>
    %170 = arith.divf %168, %169 : vector<5x128xf32>
    %171 = arith.mulf %163, %170 : vector<5x128xf32>
    %172 = arith.truncf %171 : vector<5x128xf32> to vector<5x128xbf16>
    %c0_77 = arith.constant 0 : index
    %c0_78 = arith.constant 0 : index
    %c0_79 = arith.constant 0 : index
    %173 = vector.load %arg19[%c0_77, %c0_78, %c0_79] : memref<1x128x32xbf16, #tpu.memory_space<vmem>>, vector<1x128x32xbf16>
    %174 = vector.shape_cast %173 : vector<1x128x32xbf16> to vector<128x32xbf16>
    %cst_80 = arith.constant dense<0.000000e+00> : vector<5x32xf32>
    %175 = tpu.matmul %172, %174, %cst_80 {dimension_numbers = #tpu.dot_dimension_numbers<[1], [0], [0], [1], [0, 0, 1, 1], [], []>} : vector<5x128xbf16>, vector<128x32xbf16>, vector<5x32xf32> -> vector<5x32xf32>
    %c0_81 = arith.constant 0 : index
    %c0_82 = arith.constant 0 : index
    %c0_83 = arith.constant 0 : index
    %176 = vector.load %arg20[%c0_81, %c0_82, %c0_83] : memref<1x1x32xf32, #tpu.memory_space<vmem>>, vector<1x1x32xf32>
    %177 = vector.shape_cast %176 : vector<1x1x32xf32> to vector<1x32xf32>
    %178 = vector.broadcast %177 : vector<1x32xf32> to vector<5x32xf32>
    %179 = arith.addf %175, %178 : vector<5x32xf32>
    %180 = arith.addf %129, %179 : vector<5x32xf32>
    %c0_84 = arith.constant 0 : index
    %c0_85 = arith.constant 0 : index
    %c0_86 = arith.constant 0 : index
    %181 = vector.load %arg21[%c0_84, %c0_85, %c0_86] : memref<1x5x32xf32, #tpu.memory_space<vmem>>, vector<1x5x32xf32>
    %182 = vector.shape_cast %181 : vector<1x5x32xf32> to vector<5x32xf32>
    %183 = vector.shape_cast %180 : vector<5x32xf32> to vector<1x5x32xf32>
    tpu.vector_store %arg21[%c0_84, %c0_85, %c0_86], %183 {strides = array<i32>} : memref<1x5x32xf32, #tpu.memory_space<vmem>>, vector<1x5x32xf32>,
    return
  }
  func.func @transform_0(%arg0: i32, %arg1: i32) -> (i32, i32, i32) {
    %c0_i32 = arith.constant 0 : i32
    %c0_i32_0 = arith.constant 0 : i32
    %c0_i32_1 = arith.constant 0 : i32
    return %arg0, %c0_i32, %c0_i32_0 : i32, i32, i32
  }
  func.func @transform_1(%arg0: i32, %arg1: i32) -> (i32, i32) {
    %c0_i32 = arith.constant 0 : i32
    %c0_i32_0 = arith.constant 0 : i32
    %c0_i32_1 = arith.constant 0 : i32
    return %c0_i32, %c0_i32_0 : i32, i32
  }
  func.func @transform_2(%arg0: i32, %arg1: i32) -> (i32, i32) {
    %c0_i32 = arith.constant 0 : i32
    %c0_i32_0 = arith.constant 0 : i32
    %c0_i32_1 = arith.constant 0 : i32
    return %c0_i32, %c0_i32_0 : i32, i32
  }
  func.func @transform_3(%arg0: i32, %arg1: i32) -> (i32, i32, i32) {
    %c0_i32 = arith.constant 0 : i32
    %c0_i32_0 = arith.constant 0 : i32
    %c0_i32_1 = arith.constant 0 : i32
    return %arg1, %c0_i32, %c0_i32_0 : i32, i32, i32
  }
  func.func @transform_4(%arg0: i32, %arg1: i32) -> (i32, i32, i32) {
    %c0_i32 = arith.constant 0 : i32
    %c0_i32_0 = arith.constant 0 : i32
    %c0_i32_1 = arith.constant 0 : i32
    return %arg1, %c0_i32, %c0_i32_0 : i32, i32, i32
  }
  func.func @transform_5(%arg0: i32, %arg1: i32) -> (i32, i32, i32) {
    %c0_i32 = arith.constant 0 : i32
    %c0_i32_0 = arith.constant 0 : i32
    %c0_i32_1 = arith.constant 0 : i32
    return %arg1, %c0_i32, %c0_i32_0 : i32, i32, i32
  }
  func.func @transform_6(%arg0: i32, %arg1: i32) -> (i32, i32, i32) {
    %c0_i32 = arith.constant 0 : i32
    %c0_i32_0 = arith.constant 0 : i32
    %c0_i32_1 = arith.constant 0 : i32
    return %arg1, %c0_i32, %c0_i32_0 : i32, i32, i32
  }
  func.func @transform_7(%arg0: i32, %arg1: i32) -> (i32, i32, i32) {
    %c0_i32 = arith.constant 0 : i32
    %c0_i32_0 = arith.constant 0 : i32
    %c0_i32_1 = arith.constant 0 : i32
    return %arg1, %c0_i32, %c0_i32_0 : i32, i32, i32
  }
  func.func @transform_8(%arg0: i32, %arg1: i32) -> (i32, i32, i32) {
    %c0_i32 = arith.constant 0 : i32
    %c0_i32_0 = arith.constant 0 : i32
    %c0_i32_1 = arith.constant 0 : i32
    return %arg1, %c0_i32, %c0_i32_0 : i32, i32, i32
  }
  func.func @transform_9(%arg0: i32, %arg1: i32) -> (i32, i32, i32) {
    %c0_i32 = arith.constant 0 : i32
    %c0_i32_0 = arith.constant 0 : i32
    %c0_i32_1 = arith.constant 0 : i32
    return %arg1, %c0_i32, %c0_i32_0 : i32, i32, i32
  }
  func.func @transform_10(%arg0: i32, %arg1: i32) -> (i32, i32, i32) {
    %c0_i32 = arith.constant 0 : i32
    %c0_i32_0 = arith.constant 0 : i32
    %c0_i32_1 = arith.constant 0 : i32
    return %arg1, %c0_i32, %c0_i32_0 : i32, i32, i32
  }
  func.func @transform_11(%arg0: i32, %arg1: i32) -> (i32, i32, i32) {
    %c0_i32 = arith.constant 0 : i32
    %c0_i32_0 = arith.constant 0 : i32
    %c0_i32_1 = arith.constant 0 : i32
    return %arg1, %c0_i32, %c0_i32_0 : i32, i32, i32
  }
  func.func @transform_12(%arg0: i32, %arg1: i32) -> (i32, i32, i32) {
    %c0_i32 = arith.constant 0 : i32
    %c0_i32_0 = arith.constant 0 : i32
    %c0_i32_1 = arith.constant 0 : i32
    return %arg1, %c0_i32, %c0_i32_0 : i32, i32, i32
  }
  func.func @transform_13(%arg0: i32, %arg1: i32) -> (i32, i32, i32) {
    %c0_i32 = arith.constant 0 : i32
    %c0_i32_0 = arith.constant 0 : i32
    %c0_i32_1 = arith.constant 0 : i32
    return %arg1, %c0_i32, %c0_i32_0 : i32, i32, i32
  }
  func.func @transform_14(%arg0: i32, %arg1: i32) -> (i32, i32, i32) {
    %c0_i32 = arith.constant 0 : i32
    %c0_i32_0 = arith.constant 0 : i32
    %c0_i32_1 = arith.constant 0 : i32
    return %arg1, %c0_i32, %c0_i32_0 : i32, i32, i32
  }
  func.func @transform_15(%arg0: i32, %arg1: i32) -> (i32, i32, i32) {
    %c0_i32 = arith.constant 0 : i32
    %c0_i32_0 = arith.constant 0 : i32
    %c0_i32_1 = arith.constant 0 : i32
    return %arg1, %c0_i32, %c0_i32_0 : i32, i32, i32
  }
  func.func @transform_16(%arg0: i32, %arg1: i32) -> (i32, i32, i32) {
    %c0_i32 = arith.constant 0 : i32
    %c0_i32_0 = arith.constant 0 : i32
    %c0_i32_1 = arith.constant 0 : i32
    return %arg1, %c0_i32, %c0_i32_0 : i32, i32, i32
  }
  func.func @transform_17(%arg0: i32, %arg1: i32) -> (i32, i32, i32) {
    %c0_i32 = arith.constant 0 : i32
    %c0_i32_0 = arith.constant 0 : i32
    %c0_i32_1 = arith.constant 0 : i32
    return %arg1, %c0_i32, %c0_i32_0 : i32, i32, i32
  }
  func.func @transform_18(%arg0: i32, %arg1: i32) -> (i32, i32, i32) {
    %c0_i32 = arith.constant 0 : i32
    %c0_i32_0 = arith.constant 0 : i32
    %c0_i32_1 = arith.constant 0 : i32
    return %arg1, %c0_i32, %c0_i32_0 : i32, i32, i32
  }
  func.func @transform_19(%arg0: i32, %arg1: i32) -> (i32, i32, i32) {
    %c0_i32 = arith.constant 0 : i32
    %c0_i32_0 = arith.constant 0 : i32
    %c0_i32_1 = arith.constant 0 : i32
    return %arg0, %c0_i32, %c0_i32_0 : i32, i32, i32
  }
}

</mosaic_0001>

<llo_original>
// kernel: vision_transformer_2d.1
$region0: #{vision_transformer_2d.1}
  #allocation0 [shape = 'u32[]', space=smem, size = 0x4, offset = 0x4, fixed_abs, tag = 'smem constant byte address 0x4 - core index']
  #allocation1 [shape = 'u32[144,128]{1,0:T(1,128)}', space=vmem, size = 0x12000, scoped, tag = 'internal scratch']
  %s0 = inlined_call_operand.vmem [shape: bf16[2,5,192], index: 0, kind: input, shape index: {}]
  %s1 = inlined_call_operand.vmem [shape: bf16[192,32], index: 1, kind: input, shape index: {}]
  %s2 = inlined_call_operand.vmem [shape: f32[5,32], index: 2, kind: input, shape index: {}]
  %s3 = inlined_call_operand.vmem [shape: f32[2,1,32], index: 3, kind: input, shape index: {}]
  %s4 = inlined_call_operand.vmem [shape: f32[2,1,32], index: 4, kind: input, shape index: {}]
  %s5 = inlined_call_operand.vmem [shape: bf16[2,32,32], index: 5, kind: input, shape index: {}]
  %s6 = inlined_call_operand.vmem [shape: f32[2,1,32], index: 6, kind: input, shape index: {}]
  %s7 = inlined_call_operand.vmem [shape: bf16[2,32,32], index: 7, kind: input, shape index: {}]
  %s8 = inlined_call_operand.vmem [shape: f32[2,1,32], index: 8, kind: input, shape index: {}]
  %s9 = inlined_call_operand.vmem [shape: bf16[2,32,32], index: 9, kind: input, shape index: {}]
  %s10 = inlined_call_operand.vmem [shape: f32[2,1,32], index: 10, kind: input, shape index: {}]
  %s11 = inlined_call_operand.vmem [shape: bf16[2,32,32], index: 11, kind: input, shape index: {}]
  %s12 = inlined_call_operand.vmem [shape: f32[2,1,32], index: 12, kind: input, shape index: {}]
  %s13 = inlined_call_operand.vmem [shape: f32[2,1,32], index: 13, kind: input, shape index: {}]
  %s14 = inlined_call_operand.vmem [shape: f32[2,1,32], index: 14, kind: input, shape index: {}]
  %s15 = inlined_call_operand.vmem [shape: bf16[2,32,128], index: 15, kind: input, shape index: {}]
  %s16 = inlined_call_operand.vmem [shape: f32[2,1,128], index: 16, kind: input, shape index: {}]
  %s17 = inlined_call_operand.vmem [shape: bf16[2,128,32], index: 17, kind: input, shape index: {}]
  %s18 = inlined_call_operand.vmem [shape: f32[2,1,32], index: 18, kind: input, shape index: {}]
  %s19 = inlined_call_operand.vmem [shape: f32[2,5,32], index: 19, kind: output, shape index: {}]
  %s20 = sld [smem:[#allocation0]]
  $region113: #{vision_transformer_2d.1} parent=0
    _
  %s22 = ssub.s32 1, %s20
  %s23 = scalar_select 0, %s22, %s20
  loop: start=0, step=1, limit=6
  $region2: #{vision_transformer_2d.1} parent=0 // loop_pre_header
    _
  $region3: #{vision_transformer_2d.1} parent=0 // loop_header
    %s25 = sphi 0, %s29
    %p26 = scmp.ge.s32.totalorder %s25, 6
    %s32 = sphi 0, %s44
    %s33 = sphi 0, %s40
    %s34 = sphi 0, %s32
    %s35 = sphi 0, %s33
    %s36 = sphi 0, %s34
    %s37 = sphi 0, %s35
    %s47 = sphi 0, %s49
    %s50 = sphi 0, %s47
    %s51 = sphi 0, %s50
    %s67 = sphi 0, %s51
    %s71 = sphi 0, %s71
    %s73 = sphi 0, %s71
    %s74 = sphi 0, %s73
    %s88 = sphi 0, %s74
    %s92 = sphi 0, %s92
    %s94 = sphi 0, %s92
    %s95 = sphi 0, %s94
    %s109 = sphi 0, %s95
    %s115 = sphi 0, %s117
    %s118 = sphi 0, %s115
    %s119 = sphi 0, %s118
    %s135 = sphi 0, %s119
    %s141 = sphi 0, %s143
    %s144 = sphi 0, %s141
    %s145 = sphi 0, %s144
    %s161 = sphi 0, %s145
    %s167 = sphi 0, %s169
    %s170 = sphi 0, %s167
    %s171 = sphi 0, %s170
    %s187 = sphi 0, %s171
    %s193 = sphi 0, %s195
    %s196 = sphi 0, %s193
    %s197 = sphi 0, %s196
    %s213 = sphi 0, %s197
    %s219 = sphi 0, %s221
    %s222 = sphi 0, %s219
    %s223 = sphi 0, %s222
    %s239 = sphi 0, %s223
    %s245 = sphi 0, %s247
    %s248 = sphi 0, %s245
    %s249 = sphi 0, %s248
    %s265 = sphi 0, %s249
    %s271 = sphi 0, %s273
    %s274 = sphi 0, %s271
    %s275 = sphi 0, %s274
    %s291 = sphi 0, %s275
    %s297 = sphi 0, %s299
    %s300 = sphi 0, %s297
    %s301 = sphi 0, %s300
    %s317 = sphi 0, %s301
    %s323 = sphi 0, %s325
    %s326 = sphi 0, %s323
    %s327 = sphi 0, %s326
    %s343 = sphi 0, %s327
    %s349 = sphi 0, %s351
    %s352 = sphi 0, %s349
    %s353 = sphi 0, %s352
    %s369 = sphi 0, %s353
    %s375 = sphi 0, %s377
    %s378 = sphi 0, %s375
    %s379 = sphi 0, %s378
    %s395 = sphi 0, %s379
    %s401 = sphi 0, %s403
    %s404 = sphi 0, %s401
    %s405 = sphi 0, %s404
    %s421 = sphi 0, %s405
    %s427 = sphi 0, %s429
    %s430 = sphi 0, %s427
    %s431 = sphi 0, %s430
    %s447 = sphi 0, %s431
    %s453 = sphi 0, %s455
    %s456 = sphi 0, %s453
    %s457 = sphi 0, %s456
    %s473 = sphi 0, %s457
    %s479 = sphi 0, %s481
    %s482 = sphi 0, %s479
    %s483 = sphi 0, %s482
    %s499 = sphi 0, %s483
    %s505 = sphi 0, %s507
    %s508 = sphi 0, %s505
    %s509 = sphi 0, %s508
    %s525 = sphi 0, %s509
    %s531 = sphi 0, %s533
    %s534 = sphi 0, %s531
    %s535 = sphi 0, %s534
    %s551 = sphi 0, %s535
  $region4: #{vision_transformer_2d.1} parent=0 // loop_header_branch
    %28 = sbr.rel (%p26) target = $region8
  $region5: #{vision_transformer_2d.1} parent=0 // loop_body
    %s30 = ssub.s32 %s25, 1
    %s31 = ssub.s32 %s25, 2
    %s38 = sadd.s32 1, %s33
    %p39 = scmp.ge.s32.totalorder %s38, 2
    %s40 = scalar_select %p39, 0, %s38
    %s41 = sadd.s32 1, %s32
    %s42 = scalar_select %p39, %s41, %s32
    %p43 = scmp.ge.s32.totalorder %s42, 2
    %s44 = scalar_select %p43, 0, %s42
    %s45 = ssub.s32 %s32, %s44
    %p46 = scmp.eq.s32.totalorder %s45, 0
    %s48 = sadd.s32 %s47, 1
    %s49 = scalar_select %p46, %s47, %s48
    %p52 = pneg %p46
    %p53 = scmp.eq.s32.totalorder %s25, 3
    %p54 = por %p52, %p53
    %p55 = scmp.ne.s32.totalorder %s47, %s50
    %p56 = scmp.eq.s32.totalorder %s25, 0
    %p57 = por %p55, %p56
    %p58 = scmp.ne.s32.totalorder %s47, %s50
    %p59 = scmp.eq.s32.totalorder %s30, 3
    %p60 = por %p58, %p59
    %p61 = scmp.ne.s32.totalorder %s50, %s51
    %p62 = scmp.eq.s32.totalorder %s30, 0
    %p63 = por %p61, %p62
    %p64 = scmp.ne.s32.totalorder %s50, %s51
    %p65 = scmp.eq.s32.totalorder %s31, 3
    %p66 = por %p64, %p65
    %p68 = scmp.ne.s32.totalorder %s51, %s67
    %p69 = scmp.eq.s32.totalorder %s31, 0
    %p70 = por %p68, %p69
    %s72 = sadd.s32 %s71, 1
    %p75 = scmp.eq.s32.totalorder %s25, 3
    %p76 = scmp.ne.s32.totalorder %s71, %s73
    %p77 = scmp.eq.s32.totalorder %s25, 0
    %p78 = por %p76, %p77
    %p79 = scmp.ne.s32.totalorder %s71, %s73
    %p80 = scmp.eq.s32.totalorder %s30, 3
    %p81 = por %p79, %p80
    %p82 = scmp.ne.s32.totalorder %s73, %s74
    %p83 = scmp.eq.s32.totalorder %s30, 0
    %p84 = por %p82, %p83
    %p85 = scmp.ne.s32.totalorder %s73, %s74
    %p86 = scmp.eq.s32.totalorder %s31, 3
    %p87 = por %p85, %p86
    %p89 = scmp.ne.s32.totalorder %s74, %s88
    %p90 = scmp.eq.s32.totalorder %s31, 0
    %p91 = por %p89, %p90
    %s93 = sadd.s32 %s92, 1
    %p96 = scmp.eq.s32.totalorder %s25, 3
    %p97 = scmp.ne.s32.totalorder %s92, %s94
    %p98 = scmp.eq.s32.totalorder %s25, 0
    %p99 = por %p97, %p98
    %p100 = scmp.ne.s32.totalorder %s92, %s94
    %p101 = scmp.eq.s32.totalorder %s30, 3
    %p102 = por %p100, %p101
    %p103 = scmp.ne.s32.totalorder %s94, %s95
    %p104 = scmp.eq.s32.totalorder %s30, 0
    %p105 = por %p103, %p104
    %p106 = scmp.ne.s32.totalorder %s94, %s95
    %p107 = scmp.eq.s32.totalorder %s31, 3
    %p108 = por %p106, %p107
    %p110 = scmp.ne.s32.totalorder %s95, %s109
    %p111 = scmp.eq.s32.totalorder %s31, 0
    %p112 = por %p110, %p111
    %s113 = ssub.s32 %s33, %s40
    %p114 = scmp.eq.s32.totalorder %s113, 0
    %s116 = sadd.s32 %s115, 1
    %s117 = scalar_select %p114, %s115, %s116
    %p120 = pneg %p114
    %p121 = scmp.eq.s32.totalorder %s25, 3
    %p122 = por %p120, %p121
    %p123 = scmp.ne.s32.totalorder %s115, %s118
    %p124 = scmp.eq.s32.totalorder %s25, 0
    %p125 = por %p123, %p124
    %p126 = scmp.ne.s32.totalorder %s115, %s118
    %p127 = scmp.eq.s32.totalorder %s30, 3
    %p128 = por %p126, %p127
    %p129 = scmp.ne.s32.totalorder %s118, %s119
    %p130 = scmp.eq.s32.totalorder %s30, 0
    %p131 = por %p129, %p130
    %p132 = scmp.ne.s32.totalorder %s118, %s119
    %p133 = scmp.eq.s32.totalorder %s31, 3
    %p134 = por %p132, %p133
    %p136 = scmp.ne.s32.totalorder %s119, %s135
    %p137 = scmp.eq.s32.totalorder %s31, 0
    %p138 = por %p136, %p137
    %s139 = ssub.s32 %s33, %s40
    %p140 = scmp.eq.s32.totalorder %s139, 0
    %s142 = sadd.s32 %s141, 1
    %s143 = scalar_select %p140, %s141, %s142
    %p146 = pneg %p140
    %p147 = scmp.eq.s32.totalorder %s25, 3
    %p148 = por %p146, %p147
    %p149 = scmp.ne.s32.totalorder %s141, %s144
    %p150 = scmp.eq.s32.totalorder %s25, 0
    %p151 = por %p149, %p150
    %p152 = scmp.ne.s32.totalorder %s141, %s144
    %p153 = scmp.eq.s32.totalorder %s30, 3
    %p154 = por %p152, %p153
    %p155 = scmp.ne.s32.totalorder %s144, %s145
    %p156 = scmp.eq.s32.totalorder %s30, 0
    %p157 = por %p155, %p156
    %p158 = scmp.ne.s32.totalorder %s144, %s145
    %p159 = scmp.eq.s32.totalorder %s31, 3
    %p160 = por %p158, %p159
    %p162 = scmp.ne.s32.totalorder %s145, %s161
    %p163 = scmp.eq.s32.totalorder %s31, 0
    %p164 = por %p162, %p163
    %s165 = ssub.s32 %s33, %s40
    %p166 = scmp.eq.s32.totalorder %s165, 0
    %s168 = sadd.s32 %s167, 1
    %s169 = scalar_select %p166, %s167, %s168
    %p172 = pneg %p166
    %p173 = scmp.eq.s32.totalorder %s25, 3
    %p174 = por %p172, %p173
    %p175 = scmp.ne.s32.totalorder %s167, %s170
    %p176 = scmp.eq.s32.totalorder %s25, 0
    %p177 = por %p175, %p176
    %p178 = scmp.ne.s32.totalorder %s167, %s170
    %p179 = scmp.eq.s32.totalorder %s30, 3
    %p180 = por %p178, %p179
    %p181 = scmp.ne.s32.totalorder %s170, %s171
    %p182 = scmp.eq.s32.totalorder %s30, 0
    %p183 = por %p181, %p182
    %p184 = scmp.ne.s32.totalorder %s170, %s171
    %p185 = scmp.eq.s32.totalorder %s31, 3
    %p186 = por %p184, %p185
    %p188 = scmp.ne.s32.totalorder %s171, %s187
    %p189 = scmp.eq.s32.totalorder %s31, 0
    %p190 = por %p188, %p189
    %s191 = ssub.s32 %s33, %s40
    %p192 = scmp.eq.s32.totalorder %s191, 0
    %s194 = sadd.s32 %s193, 1
    %s195 = scalar_select %p192, %s193, %s194
    %p198 = pneg %p192
    %p199 = scmp.eq.s32.totalorder %s25, 3
    %p200 = por %p198, %p199
    %p201 = scmp.ne.s32.totalorder %s193, %s196
    %p202 = scmp.eq.s32.totalorder %s25, 0
    %p203 = por %p201, %p202
    %p204 = scmp.ne.s32.totalorder %s193, %s196
    %p205 = scmp.eq.s32.totalorder %s30, 3
    %p206 = por %p204, %p205
    %p207 = scmp.ne.s32.totalorder %s196, %s197
    %p208 = scmp.eq.s32.totalorder %s30, 0
    %p209 = por %p207, %p208
    %p210 = scmp.ne.s32.totalorder %s196, %s197
    %p211 = scmp.eq.s32.totalorder %s31, 3
    %p212 = por %p210, %p211
    %p214 = scmp.ne.s32.totalorder %s197, %s213
    %p215 = scmp.eq.s32.totalorder %s31, 0
    %p216 = por %p214, %p215
    %s217 = ssub.s32 %s33, %s40
    %p218 = scmp.eq.s32.totalorder %s217, 0
    %s220 = sadd.s32 %s219, 1
    %s221 = scalar_select %p218, %s219, %s220
    %p224 = pneg %p218
    %p225 = scmp.eq.s32.totalorder %s25, 3
    %p226 = por %p224, %p225
    %p227 = scmp.ne.s32.totalorder %s219, %s222
    %p228 = scmp.eq.s32.totalorder %s25, 0
    %p229 = por %p227, %p228
    %p230 = scmp.ne.s32.totalorder %s219, %s222
    %p231 = scmp.eq.s32.totalorder %s30, 3
    %p232 = por %p230, %p231
    %p233 = scmp.ne.s32.totalorder %s222, %s223
    %p234 = scmp.eq.s32.totalorder %s30, 0
    %p235 = por %p233, %p234
    %p236 = scmp.ne.s32.totalorder %s222, %s223
    %p237 = scmp.eq.s32.totalorder %s31, 3
    %p238 = por %p236, %p237
    %p240 = scmp.ne.s32.totalorder %s223, %s239
    %p241 = scmp.eq.s32.totalorder %s31, 0
    %p242 = por %p240, %p241
    %s243 = ssub.s32 %s33, %s40
    %p244 = scmp.eq.s32.totalorder %s243, 0
    %s246 = sadd.s32 %s245, 1
    %s247 = scalar_select %p244, %s245, %s246
    %p250 = pneg %p244
    %p251 = scmp.eq.s32.totalorder %s25, 3
    %p252 = por %p250, %p251
    %p253 = scmp.ne.s32.totalorder %s245, %s248
    %p254 = scmp.eq.s32.totalorder %s25, 0
    %p255 = por %p253, %p254
    %p256 = scmp.ne.s32.totalorder %s245, %s248
    %p257 = scmp.eq.s32.totalorder %s30, 3
    %p258 = por %p256, %p257
    %p259 = scmp.ne.s32.totalorder %s248, %s249
    %p260 = scmp.eq.s32.totalorder %s30, 0
    %p261 = por %p259, %p260
    %p262 = scmp.ne.s32.totalorder %s248, %s249
    %p263 = scmp.eq.s32.totalorder %s31, 3
    %p264 = por %p262, %p263
    %p266 = scmp.ne.s32.totalorder %s249, %s265
    %p267 = scmp.eq.s32.totalorder %s31, 0
    %p268 = por %p266, %p267
    %s269 = ssub.s32 %s33, %s40
    %p270 = scmp.eq.s32.totalorder %s269, 0
    %s272 = sadd.s32 %s271, 1
    %s273 = scalar_select %p270, %s271, %s272
    %p276 = pneg %p270
    %p277 = scmp.eq.s32.totalorder %s25, 3
    %p278 = por %p276, %p277
    %p279 = scmp.ne.s32.totalorder %s271, %s274
    %p280 = scmp.eq.s32.totalorder %s25, 0
    %p281 = por %p279, %p280
    %p282 = scmp.ne.s32.totalorder %s271, %s274
    %p283 = scmp.eq.s32.totalorder %s30, 3
    %p284 = por %p282, %p283
    %p285 = scmp.ne.s32.totalorder %s274, %s275
    %p286 = scmp.eq.s32.totalorder %s30, 0
    %p287 = por %p285, %p286
    %p288 = scmp.ne.s32.totalorder %s274, %s275
    %p289 = scmp.eq.s32.totalorder %s31, 3
    %p290 = por %p288, %p289
    %p292 = scmp.ne.s32.totalorder %s275, %s291
    %p293 = scmp.eq.s32.totalorder %s31, 0
    %p294 = por %p292, %p293
    %s295 = ssub.s32 %s33, %s40
    %p296 = scmp.eq.s32.totalorder %s295, 0
    %s298 = sadd.s32 %s297, 1
    %s299 = scalar_select %p296, %s297, %s298
    %p302 = pneg %p296
    %p303 = scmp.eq.s32.totalorder %s25, 3
    %p304 = por %p302, %p303
    %p305 = scmp.ne.s32.totalorder %s297, %s300
    %p306 = scmp.eq.s32.totalorder %s25, 0
    %p307 = por %p305, %p306
    %p308 = scmp.ne.s32.totalorder %s297, %s300
    %p309 = scmp.eq.s32.totalorder %s30, 3
    %p310 = por %p308, %p309
    %p311 = scmp.ne.s32.totalorder %s300, %s301
    %p312 = scmp.eq.s32.totalorder %s30, 0
    %p313 = por %p311, %p312
    %p314 = scmp.ne.s32.totalorder %s300, %s301
    %p315 = scmp.eq.s32.totalorder %s31, 3
    %p316 = por %p314, %p315
    %p318 = scmp.ne.s32.totalorder %s301, %s317
    %p319 = scmp.eq.s32.totalorder %s31, 0
    %p320 = por %p318, %p319
    %s321 = ssub.s32 %s33, %s40
    %p322 = scmp.eq.s32.totalorder %s321, 0
    %s324 = sadd.s32 %s323, 1
    %s325 = scalar_select %p322, %s323, %s324
    %p328 = pneg %p322
    %p329 = scmp.eq.s32.totalorder %s25, 3
    %p330 = por %p328, %p329
    %p331 = scmp.ne.s32.totalorder %s323, %s326
    %p332 = scmp.eq.s32.totalorder %s25, 0
    %p333 = por %p331, %p332
    %p334 = scmp.ne.s32.totalorder %s323, %s326
    %p335 = scmp.eq.s32.totalorder %s30, 3
    %p336 = por %p334, %p335
    %p337 = scmp.ne.s32.totalorder %s326, %s327
    %p338 = scmp.eq.s32.totalorder %s30, 0
    %p339 = por %p337, %p338
    %p340 = scmp.ne.s32.totalorder %s326, %s327
    %p341 = scmp.eq.s32.totalorder %s31, 3
    %p342 = por %p340, %p341
    %p344 = scmp.ne.s32.totalorder %s327, %s343
    %p345 = scmp.eq.s32.totalorder %s31, 0
    %p346 = por %p344, %p345
    %s347 = ssub.s32 %s33, %s40
    %p348 = scmp.eq.s32.totalorder %s347, 0
    %s350 = sadd.s32 %s349, 1
    %s351 = scalar_select %p348, %s349, %s350
    %p354 = pneg %p348
    %p355 = scmp.eq.s32.totalorder %s25, 3
    %p356 = por %p354, %p355
    %p357 = scmp.ne.s32.totalorder %s349, %s352
    %p358 = scmp.eq.s32.totalorder %s25, 0
    %p359 = por %p357, %p358
    %p360 = scmp.ne.s32.totalorder %s349, %s352
    %p361 = scmp.eq.s32.totalorder %s30, 3
    %p362 = por %p360, %p361
    %p363 = scmp.ne.s32.totalorder %s352, %s353
    %p364 = scmp.eq.s32.totalorder %s30, 0
    %p365 = por %p363, %p364
    %p366 = scmp.ne.s32.totalorder %s352, %s353
    %p367 = scmp.eq.s32.totalorder %s31, 3
    %p368 = por %p366, %p367
    %p370 = scmp.ne.s32.totalorder %s353, %s369
    %p371 = scmp.eq.s32.totalorder %s31, 0
    %p372 = por %p370, %p371
    %s373 = ssub.s32 %s33, %s40
    %p374 = scmp.eq.s32.totalorder %s373, 0
    %s376 = sadd.s32 %s375, 1
    %s377 = scalar_select %p374, %s375, %s376
    %p380 = pneg %p374
    %p381 = scmp.eq.s32.totalorder %s25, 3
    %p382 = por %p380, %p381
    %p383 = scmp.ne.s32.totalorder %s375, %s378
    %p384 = scmp.eq.s32.totalorder %s25, 0
    %p385 = por %p383, %p384
    %p386 = scmp.ne.s32.totalorder %s375, %s378
    %p387 = scmp.eq.s32.totalorder %s30, 3
    %p388 = por %p386, %p387
    %p389 = scmp.ne.s32.totalorder %s378, %s379
    %p390 = scmp.eq.s32.totalorder %s30, 0
    %p391 = por %p389, %p390
    %p392 = scmp.ne.s32.totalorder %s378, %s379
    %p393 = scmp.eq.s32.totalorder %s31, 3
    %p394 = por %p392, %p393
    %p396 = scmp.ne.s32.totalorder %s379, %s395
    %p397 = scmp.eq.s32.totalorder %s31, 0
    %p398 = por %p396, %p397
    %s399 = ssub.s32 %s33, %s40
    %p400 = scmp.eq.s32.totalorder %s399, 0
    %s402 = sadd.s32 %s401, 1
    %s403 = scalar_select %p400, %s401, %s402
    %p406 = pneg %p400
    %p407 = scmp.eq.s32.totalorder %s25, 3
    %p408 = por %p406, %p407
    %p409 = scmp.ne.s32.totalorder %s401, %s404
    %p410 = scmp.eq.s32.totalorder %s25, 0
    %p411 = por %p409, %p410
    %p412 = scmp.ne.s32.totalorder %s401, %s404
    %p413 = scmp.eq.s32.totalorder %s30, 3
    %p414 = por %p412, %p413
    %p415 = scmp.ne.s32.totalorder %s404, %s405
    %p416 = scmp.eq.s32.totalorder %s30, 0
    %p417 = por %p415, %p416
    %p418 = scmp.ne.s32.totalorder %s404, %s405
    %p419 = scmp.eq.s32.totalorder %s31, 3
    %p420 = por %p418, %p419
    %p422 = scmp.ne.s32.totalorder %s405, %s421
    %p423 = scmp.eq.s32.totalorder %s31, 0
    %p424 = por %p422, %p423
    %s425 = ssub.s32 %s33, %s40
    %p426 = scmp.eq.s32.totalorder %s425, 0
    %s428 = sadd.s32 %s427, 1
    %s429 = scalar_select %p426, %s427, %s428
    %p432 = pneg %p426
    %p433 = scmp.eq.s32.totalorder %s25, 3
    %p434 = por %p432, %p433
    %p435 = scmp.ne.s32.totalorder %s427, %s430
    %p436 = scmp.eq.s32.totalorder %s25, 0
    %p437 = por %p435, %p436
    %p438 = scmp.ne.s32.totalorder %s427, %s430
    %p439 = scmp.eq.s32.totalorder %s30, 3
    %p440 = por %p438, %p439
    %p441 = scmp.ne.s32.totalorder %s430, %s431
    %p442 = scmp.eq.s32.totalorder %s30, 0
    %p443 = por %p441, %p442
    %p444 = scmp.ne.s32.totalorder %s430, %s431
    %p445 = scmp.eq.s32.totalorder %s31, 3
    %p446 = por %p444, %p445
    %p448 = scmp.ne.s32.totalorder %s431, %s447
    %p449 = scmp.eq.s32.totalorder %s31, 0
    %p450 = por %p448, %p449
    %s451 = ssub.s32 %s33, %s40
    %p452 = scmp.eq.s32.totalorder %s451, 0
    %s454 = sadd.s32 %s453, 1
    %s455 = scalar_select %p452, %s453, %s454
    %p458 = pneg %p452
    %p459 = scmp.eq.s32.totalorder %s25, 3
    %p460 = por %p458, %p459
    %p461 = scmp.ne.s32.totalorder %s453, %s456
    %p462 = scmp.eq.s32.totalorder %s25, 0
    %p463 = por %p461, %p462
    %p464 = scmp.ne.s32.totalorder %s453, %s456
    %p465 = scmp.eq.s32.totalorder %s30, 3
    %p466 = por %p464, %p465
    %p467 = scmp.ne.s32.totalorder %s456, %s457
    %p468 = scmp.eq.s32.totalorder %s30, 0
    %p469 = por %p467, %p468
    %p470 = scmp.ne.s32.totalorder %s456, %s457
    %p471 = scmp.eq.s32.totalorder %s31, 3
    %p472 = por %p470, %p471
    %p474 = scmp.ne.s32.totalorder %s457, %s473
    %p475 = scmp.eq.s32.totalorder %s31, 0
    %p476 = por %p474, %p475
    %s477 = ssub.s32 %s33, %s40
    %p478 = scmp.eq.s32.totalorder %s477, 0
    %s480 = sadd.s32 %s479, 1
    %s481 = scalar_select %p478, %s479, %s480
    %p484 = pneg %p478
    %p485 = scmp.eq.s32.totalorder %s25, 3
    %p486 = por %p484, %p485
    %p487 = scmp.ne.s32.totalorder %s479, %s482
    %p488 = scmp.eq.s32.totalorder %s25, 0
    %p489 = por %p487, %p488
    %p490 = scmp.ne.s32.totalorder %s479, %s482
    %p491 = scmp.eq.s32.totalorder %s30, 3
    %p492 = por %p490, %p491
    %p493 = scmp.ne.s32.totalorder %s482, %s483
    %p494 = scmp.eq.s32.totalorder %s30, 0
    %p495 = por %p493, %p494
    %p496 = scmp.ne.s32.totalorder %s482, %s483
    %p497 = scmp.eq.s32.totalorder %s31, 3
    %p498 = por %p496, %p497
    %p500 = scmp.ne.s32.totalorder %s483, %s499
    %p501 = scmp.eq.s32.totalorder %s31, 0
    %p502 = por %p500, %p501
    %s503 = ssub.s32 %s33, %s40
    %p504 = scmp.eq.s32.totalorder %s503, 0
    %s506 = sadd.s32 %s505, 1
    %s507 = scalar_select %p504, %s505, %s506
    %p510 = pneg %p504
    %p511 = scmp.eq.s32.totalorder %s25, 3
    %p512 = por %p510, %p511
    %p513 = scmp.ne.s32.totalorder %s505, %s508
    %p514 = scmp.eq.s32.totalorder %s25, 0
    %p515 = por %p513, %p514
    %p516 = scmp.ne.s32.totalorder %s505, %s508
    %p517 = scmp.eq.s32.totalorder %s30, 3
    %p518 = por %p516, %p517
    %p519 = scmp.ne.s32.totalorder %s508, %s509
    %p520 = scmp.eq.s32.totalorder %s30, 0
    %p521 = por %p519, %p520
    %p522 = scmp.ne.s32.totalorder %s508, %s509
    %p523 = scmp.eq.s32.totalorder %s31, 3
    %p524 = por %p522, %p523
    %p526 = scmp.ne.s32.totalorder %s509, %s525
    %p527 = scmp.eq.s32.totalorder %s31, 0
    %p528 = por %p526, %p527
    %s529 = ssub.s32 %s32, %s44
    %p530 = scmp.eq.s32.totalorder %s529, 0
    %s532 = sadd.s32 %s531, 1
    %s533 = scalar_select %p530, %s531, %s532
    %p536 = pneg %p530
    %p537 = scmp.eq.s32.totalorder %s25, 3
    %p538 = por %p536, %p537
    %p539 = scmp.ne.s32.totalorder %s531, %s534
    %p540 = scmp.eq.s32.totalorder %s25, 0
    %p541 = por %p539, %p540
    %p542 = scmp.ne.s32.totalorder %s531, %s534
    %p543 = scmp.eq.s32.totalorder %s30, 3
    %p544 = por %p542, %p543
    %p545 = scmp.ne.s32.totalorder %s534, %s535
    %p546 = scmp.eq.s32.totalorder %s30, 0
    %p547 = por %p545, %p546
    %p548 = scmp.ne.s32.totalorder %s534, %s535
    %p549 = scmp.eq.s32.totalorder %s31, 3
    %p550 = por %p548, %p549
    %p552 = scmp.ne.s32.totalorder %s535, %s551
    %p553 = scmp.eq.s32.totalorder %s31, 0
    %p554 = por %p552, %p553
    %p555 = scmp.le.s32.totalorder 1, %s25
    %p556 = scmp.lt.s32.totalorder %s25, 5
    %p557 = pnand %p555, %p556
    %p558 = pneg %p557
    // Predicated region
    $region9: #{vision_transformer_2d.1} parent=5 // pred_check
      _
    $region10: #{vision_transformer_2d.1} parent=5 // pred_check_branch
      %560 = sbr.rel (%p557) target = $region12
    $region11: #{vision_transformer_2d.1} parent=5 // pred_region
      %s561 = ssub.s32 %s25, 1
      // Predicated region
      $region13: #{vision_transformer_2d.1} parent=11 // pred_check
        %p562 = pneg %p84
      $region14: #{vision_transformer_2d.1} parent=11 // pred_check_branch
        %564 = sbr.rel (%p562) target = $region16
      $region15: #{vision_transformer_2d.1} parent=11 // pred_region
        _
      $region16: #{vision_transformer_2d.1} parent=11 // pred_fallthru
        _
      // Predicated region
      $region17: #{vision_transformer_2d.1} parent=11 // pred_check
        %p565 = pneg %p105
      $region18: #{vision_transformer_2d.1} parent=11 // pred_check_branch
        %567 = sbr.rel (%p565) target = $region20
      $region19: #{vision_transformer_2d.1} parent=11 // pred_region
        _
      $region20: #{vision_transformer_2d.1} parent=11 // pred_fallthru
        _
    $region12: #{vision_transformer_2d.1} parent=5 // pred_fallthru
      _
    %p568 = scmp.lt.s32.totalorder %s25, 4
    // Predicated region
    $region21: #{vision_transformer_2d.1} parent=5 // pred_check
      %p569 = pneg %p568
    $region22: #{vision_transformer_2d.1} parent=5 // pred_check_branch
      %571 = sbr.rel (%p569) target = $region24
    $region23: #{vision_transformer_2d.1} parent=5 // pred_region
      // Predicated region
      $region25: #{vision_transformer_2d.1} parent=23 // pred_check
        %p572 = pneg %p57
      $region26: #{vision_transformer_2d.1} parent=23 // pred_check_branch
        %574 = sbr.rel (%p572) target = $region28
      $region27: #{vision_transformer_2d.1} parent=23 // pred_region
        %p575 = scmp.lt.s32.totalorder %s32, 1
        %s576 = scalar_select %p575, %s32, 1
        %s577 = smul.addr %s576, 2
        %s578 = smul.addr %s577, 4
        %s579 = scalar_lea.vmem %s0, %s578
      $region28: #{vision_transformer_2d.1} parent=23 // pred_fallthru
        _
      // Predicated region
      $region29: #{vision_transformer_2d.1} parent=23 // pred_check
        %p580 = pneg %p125
      $region30: #{vision_transformer_2d.1} parent=23 // pred_check_branch
        %582 = sbr.rel (%p580) target = $region32
      $region31: #{vision_transformer_2d.1} parent=23 // pred_region
        %p583 = scmp.lt.s32.totalorder %s33, 1
        %s584 = scalar_select %p583, %s33, 1
        %s585 = scalar_lea.vmem %s3, %s584
      $region32: #{vision_transformer_2d.1} parent=23 // pred_fallthru
        _
      // Predicated region
      $region33: #{vision_transformer_2d.1} parent=23 // pred_check
        %p586 = pneg %p151
      $region34: #{vision_transformer_2d.1} parent=23 // pred_check_branch
        %588 = sbr.rel (%p586) target = $region36
      $region35: #{vision_transformer_2d.1} parent=23 // pred_region
        %p589 = scmp.lt.s32.totalorder %s33, 1
        %s590 = scalar_select %p589, %s33, 1
        %s591 = scalar_lea.vmem %s4, %s590
      $region36: #{vision_transformer_2d.1} parent=23 // pred_fallthru
        _
      // Predicated region
      $region37: #{vision_transformer_2d.1} parent=23 // pred_check
        %p592 = pneg %p177
      $region38: #{vision_transformer_2d.1} parent=23 // pred_check_branch
        %594 = sbr.rel (%p592) target = $region40
      $region39: #{vision_transformer_2d.1} parent=23 // pred_region
        %p595 = scmp.lt.s32.totalorder %s33, 1
        %s596 = scalar_select %p595, %s33, 1
        %s597 = smul.addr %s596, 4
        %s598 = smul.addr %s597, 4
        %s599 = scalar_lea.vmem %s5, %s598
      $region40: #{vision_transformer_2d.1} parent=23 // pred_fallthru
        _
      // Predicated region
      $region41: #{vision_transformer_2d.1} parent=23 // pred_check
        %p600 = pneg %p203
      $region42: #{vision_transformer_2d.1} parent=23 // pred_check_branch
        %602 = sbr.rel (%p600) target = $region44
      $region43: #{vision_transformer_2d.1} parent=23 // pred_region
        %p603 = scmp.lt.s32.totalorder %s33, 1
        %s604 = scalar_select %p603, %s33, 1
        %s605 = scalar_lea.vmem %s6, %s604
      $region44: #{vision_transformer_2d.1} parent=23 // pred_fallthru
        _
      // Predicated region
      $region45: #{vision_transformer_2d.1} parent=23 // pred_check
        %p606 = pneg %p229
      $region46: #{vision_transformer_2d.1} parent=23 // pred_check_branch
        %608 = sbr.rel (%p606) target = $region48
      $region47: #{vision_transformer_2d.1} parent=23 // pred_region
        %p609 = scmp.lt.s32.totalorder %s33, 1
        %s610 = scalar_select %p609, %s33, 1
        %s611 = smul.addr %s610, 4
        %s612 = smul.addr %s611, 4
        %s613 = scalar_lea.vmem %s7, %s612
      $region48: #{vision_transformer_2d.1} parent=23 // pred_fallthru
        _
      // Predicated region
      $region49: #{vision_transformer_2d.1} parent=23 // pred_check
        %p614 = pneg %p255
      $region50: #{vision_transformer_2d.1} parent=23 // pred_check_branch
        %616 = sbr.rel (%p614) target = $region52
      $region51: #{vision_transformer_2d.1} parent=23 // pred_region
        %p617 = scmp.lt.s32.totalorder %s33, 1
        %s618 = scalar_select %p617, %s33, 1
        %s619 = scalar_lea.vmem %s8, %s618
      $region52: #{vision_transformer_2d.1} parent=23 // pred_fallthru
        _
      // Predicated region
      $region53: #{vision_transformer_2d.1} parent=23 // pred_check
        %p620 = pneg %p281
      $region54: #{vision_transformer_2d.1} parent=23 // pred_check_branch
        %622 = sbr.rel (%p620) target = $region56
      $region55: #{vision_transformer_2d.1} parent=23 // pred_region
        %p623 = scmp.lt.s32.totalorder %s33, 1
        %s624 = scalar_select %p623, %s33, 1
        %s625 = smul.addr %s624, 4
        %s626 = smul.addr %s625, 4
        %s627 = scalar_lea.vmem %s9, %s626
      $region56: #{vision_transformer_2d.1} parent=23 // pred_fallthru
        _
      // Predicated region
      $region57: #{vision_transformer_2d.1} parent=23 // pred_check
        %p628 = pneg %p307
      $region58: #{vision_transformer_2d.1} parent=23 // pred_check_branch
        %630 = sbr.rel (%p628) target = $region60
      $region59: #{vision_transformer_2d.1} parent=23 // pred_region
        %p631 = scmp.lt.s32.totalorder %s33, 1
        %s632 = scalar_select %p631, %s33, 1
        %s633 = scalar_lea.vmem %s10, %s632
      $region60: #{vision_transformer_2d.1} parent=23 // pred_fallthru
        _
      // Predicated region
      $region61: #{vision_transformer_2d.1} parent=23 // pred_check
        %p634 = pneg %p333
      $region62: #{vision_transformer_2d.1} parent=23 // pred_check_branch
        %636 = sbr.rel (%p634) target = $region64
      $region63: #{vision_transformer_2d.1} parent=23 // pred_region
        %p637 = scmp.lt.s32.totalorder %s33, 1
        %s638 = scalar_select %p637, %s33, 1
        %s639 = smul.addr %s638, 4
        %s640 = smul.addr %s639, 4
        %s641 = scalar_lea.vmem %s11, %s640
      $region64: #{vision_transformer_2d.1} parent=23 // pred_fallthru
        _
      // Predicated region
      $region65: #{vision_transformer_2d.1} parent=23 // pred_check
        %p642 = pneg %p359
      $region66: #{vision_transformer_2d.1} parent=23 // pred_check_branch
        %644 = sbr.rel (%p642) target = $region68
      $region67: #{vision_transformer_2d.1} parent=23 // pred_region
        %p645 = scmp.lt.s32.totalorder %s33, 1
        %s646 = scalar_select %p645, %s33, 1
        %s647 = scalar_lea.vmem %s12, %s646
      $region68: #{vision_transformer_2d.1} parent=23 // pred_fallthru
        _
      // Predicated region
      $region69: #{vision_transformer_2d.1} parent=23 // pred_check
        %p648 = pneg %p385
      $region70: #{vision_transformer_2d.1} parent=23 // pred_check_branch
        %650 = sbr.rel (%p648) target = $region72
      $region71: #{vision_transformer_2d.1} parent=23 // pred_region
        %p651 = scmp.lt.s32.totalorder %s33, 1
        %s652 = scalar_select %p651, %s33, 1
        %s653 = scalar_lea.vmem %s13, %s652
      $region72: #{vision_transformer_2d.1} parent=23 // pred_fallthru
        _
      // Predicated region
      $region73: #{vision_transformer_2d.1} parent=23 // pred_check
        %p654 = pneg %p411
      $region74: #{vision_transformer_2d.1} parent=23 // pred_check_branch
        %656 = sbr.rel (%p654) target = $region76
      $region75: #{vision_transformer_2d.1} parent=23 // pred_region
        %p657 = scmp.lt.s32.totalorder %s33, 1
        %s658 = scalar_select %p657, %s33, 1
        %s659 = scalar_lea.vmem %s14, %s658
      $region76: #{vision_transformer_2d.1} parent=23 // pred_fallthru
        _
      // Predicated region
      $region77: #{vision_transformer_2d.1} parent=23 // pred_check
        %p660 = pneg %p437
      $region78: #{vision_transformer_2d.1} parent=23 // pred_check_branch
        %662 = sbr.rel (%p660) target = $region80
      $region79: #{vision_transformer_2d.1} parent=23 // pred_region
        %p663 = scmp.lt.s32.totalorder %s33, 1
        %s664 = scalar_select %p663, %s33, 1
        %s665 = smul.addr %s664, 4
        %s666 = smul.addr %s665, 4
        %s667 = scalar_lea.vmem %s15, %s666
      $region80: #{vision_transformer_2d.1} parent=23 // pred_fallthru
        _
      // Predicated region
      $region81: #{vision_transformer_2d.1} parent=23 // pred_check
        %p668 = pneg %p463
      $region82: #{vision_transformer_2d.1} parent=23 // pred_check_branch
        %670 = sbr.rel (%p668) target = $region84
      $region83: #{vision_transformer_2d.1} parent=23 // pred_region
        %p671 = scmp.lt.s32.totalorder %s33, 1
        %s672 = scalar_select %p671, %s33, 1
        %s673 = scalar_lea.vmem %s16, %s672
      $region84: #{vision_transformer_2d.1} parent=23 // pred_fallthru
        _
      // Predicated region
      $region85: #{vision_transformer_2d.1} parent=23 // pred_check
        %p674 = pneg %p489
      $region86: #{vision_transformer_2d.1} parent=23 // pred_check_branch
        %676 = sbr.rel (%p674) target = $region88
      $region87: #{vision_transformer_2d.1} parent=23 // pred_region
        %p677 = scmp.lt.s32.totalorder %s33, 1
        %s678 = scalar_select %p677, %s33, 1
        %s679 = smul.addr %s678, 16
        %s680 = smul.addr %s679, 4
        %s681 = scalar_lea.vmem %s17, %s680
      $region88: #{vision_transformer_2d.1} parent=23 // pred_fallthru
        _
      // Predicated region
      $region89: #{vision_transformer_2d.1} parent=23 // pred_check
        %p682 = pneg %p515
      $region90: #{vision_transformer_2d.1} parent=23 // pred_check_branch
        %684 = sbr.rel (%p682) target = $region92
      $region91: #{vision_transformer_2d.1} parent=23 // pred_region
        %p685 = scmp.lt.s32.totalorder %s33, 1
        %s686 = scalar_select %p685, %s33, 1
        %s687 = scalar_lea.vmem %s18, %s686
      $region92: #{vision_transformer_2d.1} parent=23 // pred_fallthru
        _
    $region24: #{vision_transformer_2d.1} parent=5 // pred_fallthru
      _
    %p688 = scmp.le.s32.totalorder 1, %s25
    %p689 = scmp.lt.s32.totalorder %s25, 5
    %p690 = pnand %p688, %p689
    %p691 = pneg %p690
    // Predicated region
    $region93: #{vision_transformer_2d.1} parent=5 // pred_check
      _
    $region94: #{vision_transformer_2d.1} parent=5 // pred_check_branch
      %693 = sbr.rel (%p690) target = $region96
    $region95: #{vision_transformer_2d.1} parent=5 // pred_region
      %s694 = ssub.s32 %s25, 1
      %p695 = scmp.lt.s32.totalorder %s34, 1
      %s696 = scalar_select %p695, %s34, 1
      %s697 = smul.addr %s696, 2
      %s698 = smul.addr %s697, 4
      %s699 = scalar_lea.vmem %s0, %s698
      %p700 = pneg %p63
      %p701 = pneg %p60
      %p702 = pneg %p84
      %p703 = pneg %p81
      %p704 = pneg %p105
      %p705 = pneg %p102
      %p706 = scmp.lt.s32.totalorder %s35, 1
      %s707 = scalar_select %p706, %s35, 1
      %s708 = scalar_lea.vmem %s3, %s707
      %p709 = pneg %p131
      %p710 = pneg %p128
      %p711 = scmp.lt.s32.totalorder %s35, 1
      %s712 = scalar_select %p711, %s35, 1
      %s713 = scalar_lea.vmem %s4, %s712
      %p714 = pneg %p157
      %p715 = pneg %p154
      %p716 = scmp.lt.s32.totalorder %s35, 1
      %s717 = scalar_select %p716, %s35, 1
      %s718 = smul.addr %s717, 4
      %s719 = smul.addr %s718, 4
      %s720 = scalar_lea.vmem %s5, %s719
      %p721 = pneg %p183
      %p722 = pneg %p180
      %p723 = scmp.lt.s32.totalorder %s35, 1
      %s724 = scalar_select %p723, %s35, 1
      %s725 = scalar_lea.vmem %s6, %s724
      %p726 = pneg %p209
      %p727 = pneg %p206
      %p728 = scmp.lt.s32.totalorder %s35, 1
      %s729 = scalar_select %p728, %s35, 1
      %s730 = smul.addr %s729, 4
      %s731 = smul.addr %s730, 4
      %s732 = scalar_lea.vmem %s7, %s731
      %p733 = pneg %p235
      %p734 = pneg %p232
      %p735 = scmp.lt.s32.totalorder %s35, 1
      %s736 = scalar_select %p735, %s35, 1
      %s737 = scalar_lea.vmem %s8, %s736
      %p738 = pneg %p261
      %p739 = pneg %p258
      %p740 = scmp.lt.s32.totalorder %s35, 1
      %s741 = scalar_select %p740, %s35, 1
      %s742 = smul.addr %s741, 4
      %s743 = smul.addr %s742, 4
      %s744 = scalar_lea.vmem %s9, %s743
      %p745 = pneg %p287
      %p746 = pneg %p284
      %p747 = scmp.lt.s32.totalorder %s35, 1
      %s748 = scalar_select %p747, %s35, 1
      %s749 = scalar_lea.vmem %s10, %s748
      %p750 = pneg %p313
      %p751 = pneg %p310
      %p752 = scmp.lt.s32.totalorder %s35, 1
      %s753 = scalar_select %p752, %s35, 1
      %s754 = smul.addr %s753, 4
      %s755 = smul.addr %s754, 4
      %s756 = scalar_lea.vmem %s11, %s755
      %p757 = pneg %p339
      %p758 = pneg %p336
      %p759 = scmp.lt.s32.totalorder %s35, 1
      %s760 = scalar_select %p759, %s35, 1
      %s761 = scalar_lea.vmem %s12, %s760
      %p762 = pneg %p365
      %p763 = pneg %p362
      %p764 = scmp.lt.s32.totalorder %s35, 1
      %s765 = scalar_select %p764, %s35, 1
      %s766 = scalar_lea.vmem %s13, %s765
      %p767 = pneg %p391
      %p768 = pneg %p388
      %p769 = scmp.lt.s32.totalorder %s35, 1
      %s770 = scalar_select %p769, %s35, 1
      %s771 = scalar_lea.vmem %s14, %s770
      %p772 = pneg %p417
      %p773 = pneg %p414
      %p774 = scmp.lt.s32.totalorder %s35, 1
      %s775 = scalar_select %p774, %s35, 1
      %s776 = smul.addr %s775, 4
      %s777 = smul.addr %s776, 4
      %s778 = scalar_lea.vmem %s15, %s777
      %p779 = pneg %p443
      %p780 = pneg %p440
      %p781 = scmp.lt.s32.totalorder %s35, 1
      %s782 = scalar_select %p781, %s35, 1
      %s783 = scalar_lea.vmem %s16, %s782
      %p784 = pneg %p469
      %p785 = pneg %p466
      %p786 = scmp.lt.s32.totalorder %s35, 1
      %s787 = scalar_select %p786, %s35, 1
      %s788 = smul.addr %s787, 16
      %s789 = smul.addr %s788, 4
      %s790 = scalar_lea.vmem %s17, %s789
      %p791 = pneg %p495
      %p792 = pneg %p492
      %p793 = scmp.lt.s32.totalorder %s35, 1
      %s794 = scalar_select %p793, %s35, 1
      %s795 = scalar_lea.vmem %s18, %s794
      %p796 = pneg %p521
      %p797 = pneg %p518
      %p798 = pneg %p547
      %p799 = pneg %p544
      %p800 = scmp.lt.s32.totalorder %s34, 1
      %s801 = scalar_select %p800, %s34, 1
      %s802 = smul.addr %s801, 8
      %s803 = scalar_lea.vmem %s19, %s802
      %p804 = scmp.lt.s32.totalorder %s34, 1
      %s805 = scalar_select %p804, %s34, 1
      %s806 = smul.addr %s805, 2
      %s807 = smul.addr %s806, 4
      %s808 = scalar_lea.vmem %s0, %s807
      %p809 = scmp.lt.s32.totalorder %s35, 1
      %s810 = scalar_select %p809, %s35, 1
      %s811 = scalar_lea.vmem %s3, %s810
      %p812 = scmp.lt.s32.totalorder %s35, 1
      %s813 = scalar_select %p812, %s35, 1
      %s814 = scalar_lea.vmem %s4, %s813
      %p815 = scmp.lt.s32.totalorder %s35, 1
      %s816 = scalar_select %p815, %s35, 1
      %s817 = smul.addr %s816, 4
      %s818 = smul.addr %s817, 4
      %s819 = scalar_lea.vmem %s5, %s818
      %p820 = scmp.lt.s32.totalorder %s35, 1
      %s821 = scalar_select %p820, %s35, 1
      %s822 = scalar_lea.vmem %s6, %s821
      %p823 = scmp.lt.s32.totalorder %s35, 1
      %s824 = scalar_select %p823, %s35, 1
      %s825 = smul.addr %s824, 4
      %s826 = smul.addr %s825, 4
      %s827 = scalar_lea.vmem %s7, %s826
      %p828 = scmp.lt.s32.totalorder %s35, 1
      %s829 = scalar_select %p828, %s35, 1
      %s830 = scalar_lea.vmem %s8, %s829
      %p831 = scmp.lt.s32.totalorder %s35, 1
      %s832 = scalar_select %p831, %s35, 1
      %s833 = smul.addr %s832, 4
      %s834 = smul.addr %s833, 4
      %s835 = scalar_lea.vmem %s9, %s834
      %p836 = scmp.lt.s32.totalorder %s35, 1
      %s837 = scalar_select %p836, %s35, 1
      %s838 = scalar_lea.vmem %s10, %s837
      %p839 = scmp.lt.s32.totalorder %s35, 1
      %s840 = scalar_select %p839, %s35, 1
      %s841 = smul.addr %s840, 4
      %s842 = smul.addr %s841, 4
      %s843 = scalar_lea.vmem %s11, %s842
      %p844 = scmp.lt.s32.totalorder %s35, 1
      %s845 = scalar_select %p844, %s35, 1
      %s846 = scalar_lea.vmem %s12, %s845
      %p847 = scmp.lt.s32.totalorder %s35, 1
      %s848 = scalar_select %p847, %s35, 1
      %s849 = scalar_lea.vmem %s13, %s848
      %p850 = scmp.lt.s32.totalorder %s35, 1
      %s851 = scalar_select %p850, %s35, 1
      %s852 = scalar_lea.vmem %s14, %s851
      %p853 = scmp.lt.s32.totalorder %s35, 1
      %s854 = scalar_select %p853, %s35, 1
      %s855 = smul.addr %s854, 4
      %s856 = smul.addr %s855, 4
      %s857 = scalar_lea.vmem %s15, %s856
      %p858 = scmp.lt.s32.totalorder %s35, 1
      %s859 = scalar_select %p858, %s35, 1
      %s860 = scalar_lea.vmem %s16, %s859
      %p861 = scmp.lt.s32.totalorder %s35, 1
      %s862 = scalar_select %p861, %s35, 1
      %s863 = smul.addr %s862, 16
      %s864 = smul.addr %s863, 4
      %s865 = scalar_lea.vmem %s17, %s864
      %p866 = scmp.lt.s32.totalorder %s35, 1
      %s867 = scalar_select %p866, %s35, 1
      %s868 = scalar_lea.vmem %s18, %s867
      %p869 = scmp.lt.s32.totalorder %s34, 1
      %s870 = scalar_select %p869, %s34, 1
      %s871 = smul.addr %s870, 8
      %s872 = scalar_lea.vmem %s19, %s871
      %p874 = scmp.eq.s32.totalorder %s35, 0
      // Predicated region
      $region97: #{vision_transformer_2d.1} parent=95 // pred_check
        %p875 = pneg %p874
      $region98: #{vision_transformer_2d.1} parent=95 // pred_check_branch
        %877 = sbr.rel (%p875) target = $region100
      $region99: #{vision_transformer_2d.1} parent=95 // pred_region
        %v878 = vld [vmem:[%s808] sm:$0x77]
        %v879 = vld [vmem:[%s1] sm:$0xf]
        %v880 = vld [vmem:[%s1 + $0x4] sm:$0xf]
        %v881 = vld [vmem:[%s1 + $0x8] sm:$0xf]
        %v882 = vld [vmem:[%s1 + $0xc] sm:$0xf]
        %v883 = vld [vmem:[%s1 + $0x10] sm:$0xf]
        %v884 = vld [vmem:[%s1 + $0x14] sm:$0xf]
        %v885 = vld [vmem:[%s1 + $0x18] sm:$0xf]
        %v886 = vld [vmem:[%s1 + $0x1c] sm:$0xf]
        %v887 = vld [vmem:[%s1 + $0x20] sm:$0xf]
        %v888 = vld [vmem:[%s1 + $0x24] sm:$0xf]
        %v889 = vld [vmem:[%s1 + $0x28] sm:$0xf]
        %v890 = vld [vmem:[%s1 + $0x2c] sm:$0xf]
        %v891 = vld [vmem:[%s1 + $0x30] sm:$0xf]
        %v892 = vld [vmem:[%s1 + $0x34] sm:$0xf]
        %v893 = vld [vmem:[%s1 + $0x38] sm:$0xf]
        %v894 = vld [vmem:[%s1 + $0x3c] sm:$0xf]
        %v895 = vld [vmem:[%s1 + $0x40] sm:$0xf]
        %v896 = vld [vmem:[%s1 + $0x44] sm:$0xf]
        %v897 = vld [vmem:[%s1 + $0x48] sm:$0xf]
        %v898 = vld [vmem:[%s1 + $0x4c] sm:$0xf]
        %v899 = vld [vmem:[%s1 + $0x50] sm:$0xf]
        %v900 = vld [vmem:[%s1 + $0x54] sm:$0xf]
        %v901 = vld [vmem:[%s1 + $0x58] sm:$0xf]
        %v902 = vld [vmem:[%s1 + $0x5c] sm:$0xf]
        %v903 = vld [vmem:[%s2] sm:$0x1f]
        %v905 = vunpack.c.l.b16 %v878
        %v906 = vunpack.c.h.b16 %v878
        %v907 = vpack.c.b16 %v905, %v905
        %v908 = vpack.c.b16 %v906, %v906
        %v934 = vunpack.c.l.b16 %v879
        %v935 = vunpack.c.l.b16 %v880
        %v936 = vunpack.c.l.b16 %v881
        %v937 = vunpack.c.l.b16 %v882
        %v938 = vunpack.c.l.b16 %v883
        %v939 = vunpack.c.l.b16 %v884
        %v940 = vunpack.c.l.b16 %v885
        %v941 = vunpack.c.l.b16 %v886
        %v942 = vunpack.c.l.b16 %v887
        %v943 = vunpack.c.l.b16 %v888
        %v944 = vunpack.c.l.b16 %v889
        %v945 = vunpack.c.l.b16 %v890
        %v946 = vunpack.c.l.b16 %v891
        %v947 = vunpack.c.l.b16 %v892
        %v948 = vunpack.c.l.b16 %v893
        %v949 = vunpack.c.l.b16 %v894
        %v950 = vunpack.c.l.b16 %v895
        %v951 = vunpack.c.l.b16 %v896
        %v952 = vunpack.c.l.b16 %v897
        %v953 = vunpack.c.l.b16 %v898
        %v954 = vunpack.c.l.b16 %v899
        %v955 = vunpack.c.l.b16 %v900
        %v956 = vunpack.c.l.b16 %v901
        %v957 = vunpack.c.l.b16 %v902
        %v958 = vpack.c.b16 %v935, %v934
        %v959 = vpack.c.b16 %v937, %v936
        %v960 = vpack.c.b16 %v939, %v938
        %v961 = vpack.c.b16 %v941, %v940
        %v962 = vpack.c.b16 %v943, %v942
        %v963 = vpack.c.b16 %v945, %v944
        %v964 = vpack.c.b16 %v947, %v946
        %v965 = vpack.c.b16 %v949, %v948
        %v966 = vpack.c.b16 %v951, %v950
        %v967 = vpack.c.b16 %v953, %v952
        %v968 = vpack.c.b16 %v955, %v954
        %v969 = vpack.c.b16 %v957, %v956
        %vm982 = vcmask 523264
        %v984 = vsel %vm982, %v908, 0
        %986 = vmatprep.subr.bf16.mxu0 0
        %987 = vmatpush1.bf16.msra.mxu0 %v965
        %988 = vmatprep.subr.bf16.mxu0 0
        %989 = vmatpush1.bf16.msra.mxu0 %v964
        %990 = vmatprep.subr.bf16.mxu0 0
        %991 = vmatpush1.bf16.msra.mxu0 %v963
        %992 = vmatprep.subr.bf16.mxu0 0
        %993 = vmatpush1.bf16.msra.mxu0 %v962
        %994 = vmatprep.subr.bf16.mxu0 0
        %995 = vmatpush1.bf16.msra.mxu0 %v961
        %996 = vmatprep.subr.bf16.mxu0 0
        %997 = vmatpush1.bf16.msra.mxu0 %v960
        %998 = vmatprep.subr.bf16.mxu0 0
        %999 = vmatpush1.bf16.msra.mxu0 %v959
        %1000 = vmatprep.subr.bf16.mxu0 0
        %1001 = vmatpush1.bf16.msra.mxu0 %v958
        %1002 = vmatprep.subr.bf16.mxu0 0
        %1003 = vmatpush2.bf16.msra.mxu0 0
        %1004 = vmatprep.subr.bf16.mxu0 0
        %1005 = vmatpush2.bf16.msra.mxu0 0
        %1006 = vmatprep.subr.bf16.mxu0 0
        %1007 = vmatpush2.bf16.msra.mxu0 0
        %1008 = vmatprep.subr.bf16.mxu0 0
        %1009 = vmatpush2.bf16.msra.mxu0 0
        %1010 = vmatprep.subr.bf16.mxu0 0
        %1011 = vmatpush2.bf16.msra.mxu0 %v969
        %1012 = vmatprep.subr.bf16.mxu0 0
        %1013 = vmatpush2.bf16.msra.mxu0 %v968
        %1014 = vmatprep.subr.bf16.mxu0 0
        %1015 = vmatpush2.bf16.msra.mxu0 %v967
        %1016 = vmatprep.subr.bf16.mxu0 0
        %1017 = vmatpush2.bf16.msra.mxu0 %v966
        %1018 = vmatprep.mubr.bf16.mxu0 %v984
        %1019 = vmatmul.mubr.bf16.gmra.mxu0 %v907
        %v1020 = vpop.f32.mrf.mxu0
        %v1021 = vadd.f32 %v903, %v1020
        %v1022 = vpop.f32.mrf.mxu0
        %v1023 = vpop.f32.mrf.mxu0
        %v1024 = vpop.f32.mrf.mxu0
        %1025 = vdwg.mxu0
        %vm1026 = vcmask 258048
        %1027 = vst.msk [vmem:[%s872] sm:$0x1f] %vm1026, %v1021
      $region100: #{vision_transformer_2d.1} parent=95 // pred_fallthru
        _
      %v1028 = vld [vmem:[%s872] sm:$0x1f]
      %v1029 = vld [vmem:[%s811] sm:$0x1]
      %v1030 = vld [vmem:[%s814] sm:$0x1]
      %vm1031 = vcmask 258048
      %v1032 = vsel %vm1031, %v1028, 0.0
      %1033 = vadd.xlane.f32.xlu0 %v1032
      %v1034 = vpop.xlane.xlu0 %1033
      %v1035 = vrcp.pop 32.0
      %v1036 = vmul.f32 %v1034, %v1035
      %v1037 = vsub.f32 %v1028, %v1036
      %v1038 = vmul.f32 %v1037, %v1037
      %v1039 = vsel %vm1031, %v1038, 0.0
      %1040 = vadd.xlane.f32.xlu0 %v1039
      %v1041 = vpop.xlane.xlu0 %1040
      %v1042 = vmul.f32 %v1041, %v1035
      %v1043 = vadd.f32 %v1042, 1e-05
      %v1044 = vrsqrt.pop %v1043
      %v1045 = vmul.f32 %v1037, %v1044
      %v1047 = vlaneseq
      %v1048 = vshrl.u32 %v1047, 7
      %v1049 = vsub.s32 0, %v1048
      %v1050 = vrot.slane %v1029, %v1049
      %v1052 = vmul.f32 %v1045, %v1050
      %v1054 = vlaneseq
      %v1055 = vshrl.u32 %v1054, 7
      %v1056 = vsub.s32 0, %v1055
      %v1057 = vrot.slane %v1030, %v1056
      %v1059 = vadd.f32 %v1052, %v1057
      %v1060 = vpack.c.bf16 %v1059, %v1059
      %v1061 = vld [vmem:[%s819] sm:$0xf]
      %v1062 = vld [vmem:[%s819 + $0x4] sm:$0xf]
      %v1063 = vld [vmem:[%s819 + $0x8] sm:$0xf]
      %v1064 = vld [vmem:[%s819 + $0xc] sm:$0xf]
      %v1065 = vld [vmem:[%s822] sm:$0x1]
      %v1067 = vlaneseq
      %v1068 = vshrl.u32 %v1067, 7
      %v1069 = vsub.s32 0, %v1068
      %v1070 = vrot.slane %v1065, %v1069
      %v1076 = vunpack.c.l.b16 %v1061
      %v1077 = vunpack.c.l.b16 %v1062
      %v1078 = vunpack.c.l.b16 %v1063
      %v1079 = vunpack.c.l.b16 %v1064
      %v1080 = vpack.c.b16 %v1077, %v1076
      %v1081 = vpack.c.b16 %v1079, %v1078
      %vm1084 = vcmask 261120
      %v1086 = vsel %vm1084, %v1060, 0
      %1088 = vmatprep.subr.bf16.mxu0 0
      %1089 = vmatpush1.bf16.msra.mxu0 0
      %1090 = vmatprep.subr.bf16.mxu0 0
      %1091 = vmatpush1.bf16.msra.mxu0 0
      %1092 = vmatprep.subr.bf16.mxu0 0
      %1093 = vmatpush1.bf16.msra.mxu0 0
      %1094 = vmatprep.subr.bf16.mxu0 0
      %1095 = vmatpush1.bf16.msra.mxu0 0
      %1096 = vmatprep.subr.bf16.mxu0 0
      %1097 = vmatpush1.bf16.msra.mxu0 0
      %1098 = vmatprep.subr.bf16.mxu0 0
      %1099 = vmatpush1.bf16.msra.mxu0 0
      %1100 = vmatprep.subr.bf16.mxu0 0
      %1101 = vmatpush1.bf16.msra.mxu0 %v1081
      %1102 = vmatprep.subr.bf16.mxu0 0
      %1103 = vmatpush1.bf16.msra.mxu0 %v1080
      %1104 = vmatprep.subr.bf16.mxu0 0
      %1105 = vmatpush2.bf16.msra.mxu0 0
      %1106 = vmatprep.subr.bf16.mxu0 0
      %1107 = vmatpush2.bf16.msra.mxu0 0
      %1108 = vmatprep.subr.bf16.mxu0 0
      %1109 = vmatpush2.bf16.msra.mxu0 0
      %1110 = vmatprep.subr.bf16.mxu0 0
      %1111 = vmatpush2.bf16.msra.mxu0 0
      %1112 = vmatprep.subr.bf16.mxu0 0
      %1113 = vmatpush2.bf16.msra.mxu0 0
      %1114 = vmatprep.subr.bf16.mxu0 0
      %1115 = vmatpush2.bf16.msra.mxu0 0
      %1116 = vmatprep.subr.bf16.mxu0 0
      %1117 = vmatpush2.bf16.msra.mxu0 0
      %1118 = vmatprep.subr.bf16.mxu0 0
      %1119 = vmatpush2.bf16.msra.mxu0 0
      %1120 = vmatprep.mubr.bf16.mxu0 0
      %1121 = vmatmul.mubr.bf16.gmra.mxu0 %v1086
      %v1122 = vpop.f32.mrf.mxu0
      %v1123 = vadd.f32 %v1070, %v1122
      %v1124 = vpop.f32.mrf.mxu0
      %v1125 = vpop.f32.mrf.mxu0
      %v1126 = vpop.f32.mrf.mxu0
      %1127 = vdwg.mxu0
      %v1128 = vpack.c.bf16 %v1123, %v1123
      %v1129 = vld [vmem:[%s827] sm:$0xf]
      %v1130 = vld [vmem:[%s827 + $0x4] sm:$0xf]
      %v1131 = vld [vmem:[%s827 + $0x8] sm:$0xf]
      %v1132 = vld [vmem:[%s827 + $0xc] sm:$0xf]
      %v1133 = vld [vmem:[%s830] sm:$0x1]
      %v1135 = vlaneseq
      %v1136 = vshrl.u32 %v1135, 7
      %v1137 = vsub.s32 0, %v1136
      %v1138 = vrot.slane %v1133, %v1137
      %v1144 = vunpack.c.l.b16 %v1129
      %v1145 = vunpack.c.l.b16 %v1130
      %v1146 = vunpack.c.l.b16 %v1131
      %v1147 = vunpack.c.l.b16 %v1132
      %v1148 = vpack.c.b16 %v1145, %v1144
      %v1149 = vpack.c.b16 %v1147, %v1146
      %1152 = vmatprep.subr.bf16.mxu0 0
      %1153 = vmatpush1.bf16.msra.mxu0 0
      %1154 = vmatprep.subr.bf16.mxu0 0
      %1155 = vmatpush1.bf16.msra.mxu0 0
      %1156 = vmatprep.subr.bf16.mxu0 0
      %1157 = vmatpush1.bf16.msra.mxu0 0
      %1158 = vmatprep.subr.bf16.mxu0 0
      %1159 = vmatpush1.bf16.msra.mxu0 0
      %1160 = vmatprep.subr.bf16.mxu0 0
      %1161 = vmatpush1.bf16.msra.mxu0 0
      %1162 = vmatprep.subr.bf16.mxu0 0
      %1163 = vmatpush1.bf16.msra.mxu0 0
      %1164 = vmatprep.subr.bf16.mxu0 0
      %1165 = vmatpush1.bf16.msra.mxu0 %v1149
      %1166 = vmatprep.subr.bf16.mxu0 0
      %1167 = vmatpush1.bf16.msra.mxu0 %v1148
      %1168 = vmatprep.subr.bf16.mxu0 0
      %1169 = vmatpush2.bf16.msra.mxu0 0
      %1170 = vmatprep.subr.bf16.mxu0 0
      %1171 = vmatpush2.bf16.msra.mxu0 0
      %1172 = vmatprep.subr.bf16.mxu0 0
      %1173 = vmatpush2.bf16.msra.mxu0 0
      %1174 = vmatprep.subr.bf16.mxu0 0
      %1175 = vmatpush2.bf16.msra.mxu0 0
      %1176 = vmatprep.subr.bf16.mxu0 0
      %1177 = vmatpush2.bf16.msra.mxu0 0
      %1178 = vmatprep.subr.bf16.mxu0 0
      %1179 = vmatpush2.bf16.msra.mxu0 0
      %1180 = vmatprep.subr.bf16.mxu0 0
      %1181 = vmatpush2.bf16.msra.mxu0 0
      %1182 = vmatprep.subr.bf16.mxu0 0
      %1183 = vmatpush2.bf16.msra.mxu0 0
      %1184 = vmatprep.mubr.bf16.mxu0 0
      %1185 = vmatmul.mubr.bf16.gmra.mxu0 %v1086
      %v1186 = vpop.f32.mrf.mxu0
      %v1187 = vadd.f32 %v1138, %v1186
      %v1188 = vpop.f32.mrf.mxu0
      %v1189 = vpop.f32.mrf.mxu0
      %v1190 = vpop.f32.mrf.mxu0
      %1191 = vdwg.mxu0
      %v1192 = vpack.c.bf16 %v1187, %v1187
      %v1193 = vld [vmem:[%s835] sm:$0xf]
      %v1194 = vld [vmem:[%s835 + $0x4] sm:$0xf]
      %v1195 = vld [vmem:[%s835 + $0x8] sm:$0xf]
      %v1196 = vld [vmem:[%s835 + $0xc] sm:$0xf]
      %v1197 = vld [vmem:[%s838] sm:$0x1]
      %v1199 = vlaneseq
      %v1200 = vshrl.u32 %v1199, 7
      %v1201 = vsub.s32 0, %v1200
      %v1202 = vrot.slane %v1197, %v1201
      %v1208 = vunpack.c.l.b16 %v1193
      %v1209 = vunpack.c.l.b16 %v1194
      %v1210 = vunpack.c.l.b16 %v1195
      %v1211 = vunpack.c.l.b16 %v1196
      %v1212 = vpack.c.b16 %v1209, %v1208
      %v1213 = vpack.c.b16 %v1211, %v1210
      %1216 = vmatprep.subr.bf16.mxu0 0
      %1217 = vmatpush1.bf16.msra.mxu0 0
      %1218 = vmatprep.subr.bf16.mxu0 0
      %1219 = vmatpush1.bf16.msra.mxu0 0
      %1220 = vmatprep.subr.bf16.mxu0 0
      %1221 = vmatpush1.bf16.msra.mxu0 0
      %1222 = vmatprep.subr.bf16.mxu0 0
      %1223 = vmatpush1.bf16.msra.mxu0 0
      %1224 = vmatprep.subr.bf16.mxu0 0
      %1225 = vmatpush1.bf16.msra.mxu0 0
      %1226 = vmatprep.subr.bf16.mxu0 0
      %1227 = vmatpush1.bf16.msra.mxu0 0
      %1228 = vmatprep.subr.bf16.mxu0 0
      %1229 = vmatpush1.bf16.msra.mxu0 %v1213
      %1230 = vmatprep.subr.bf16.mxu0 0
      %1231 = vmatpush1.bf16.msra.mxu0 %v1212
      %1232 = vmatprep.subr.bf16.mxu0 0
      %1233 = vmatpush2.bf16.msra.mxu0 0
      %1234 = vmatprep.subr.bf16.mxu0 0
      %1235 = vmatpush2.bf16.msra.mxu0 0
      %1236 = vmatprep.subr.bf16.mxu0 0
      %1237 = vmatpush2.bf16.msra.mxu0 0
      %1238 = vmatprep.subr.bf16.mxu0 0
      %1239 = vmatpush2.bf16.msra.mxu0 0
      %1240 = vmatprep.subr.bf16.mxu0 0
      %1241 = vmatpush2.bf16.msra.mxu0 0
      %1242 = vmatprep.subr.bf16.mxu0 0
      %1243 = vmatpush2.bf16.msra.mxu0 0
      %1244 = vmatprep.subr.bf16.mxu0 0
      %1245 = vmatpush2.bf16.msra.mxu0 0
      %1246 = vmatprep.subr.bf16.mxu0 0
      %1247 = vmatpush2.bf16.msra.mxu0 0
      %1248 = vmatprep.mubr.bf16.mxu0 0
      %1249 = vmatmul.mubr.bf16.gmra.mxu0 %v1086
      %v1250 = vpop.f32.mrf.mxu0
      %v1251 = vadd.f32 %v1202, %v1250
      %v1252 = vpop.f32.mrf.mxu0
      %v1253 = vpop.f32.mrf.mxu0
      %v1254 = vpop.f32.mrf.mxu0
      %1255 = vdwg.mxu0
      %v1256 = vpack.c.bf16 %v1251, %v1251
      %vm1257 = vcmask 64512
      %v1259 = vsel %vm1257, %v1128, 0
      %v1262 = vsel %vm1257, %v1192, 0
      %1264 = vmatprep.subr.bf16.mxu0 0
      %1265 = vmatpush1.bf16.xpose.msra.mxu0 0
      %1266 = vmatprep.subr.bf16.mxu0 0
      %1267 = vmatpush1.bf16.xpose.msra.mxu0 0
      %1268 = vmatprep.subr.bf16.mxu0 0
      %1269 = vmatpush1.bf16.xpose.msra.mxu0 0
      %1270 = vmatprep.subr.bf16.mxu0 0
      %1271 = vmatpush1.bf16.xpose.msra.mxu0 0
      %1272 = vmatprep.subr.bf16.mxu0 0
      %1273 = vmatpush1.bf16.xpose.msra.mxu0 0
      %1274 = vmatprep.subr.bf16.mxu0 0
      %1275 = vmatpush1.bf16.xpose.msra.mxu0 0
      %1276 = vmatprep.subr.bf16.mxu0 0
      %1277 = vmatpush1.bf16.xpose.msra.mxu0 0
      %1278 = vmatprep.subr.bf16.mxu0 0
      %1279 = vmatpush1.bf16.xpose.msra.mxu0 %v1262
      %1280 = vmatprep.subr.bf16.mxu0 0
      %1281 = vmatpush2.bf16.xpose.msra.mxu0 0
      %1282 = vmatprep.subr.bf16.mxu0 0
      %1283 = vmatpush2.bf16.xpose.msra.mxu0 0
      %1284 = vmatprep.subr.bf16.mxu0 0
      %1285 = vmatpush2.bf16.xpose.msra.mxu0 0
      %1286 = vmatprep.subr.bf16.mxu0 0
      %1287 = vmatpush2.bf16.xpose.msra.mxu0 0
      %1288 = vmatprep.subr.bf16.mxu0 0
      %1289 = vmatpush2.bf16.xpose.msra.mxu0 0
      %1290 = vmatprep.subr.bf16.mxu0 0
      %1291 = vmatpush2.bf16.xpose.msra.mxu0 0
      %1292 = vmatprep.subr.bf16.mxu0 0
      %1293 = vmatpush2.bf16.xpose.msra.mxu0 0
      %1294 = vmatprep.subr.bf16.mxu0 0
      %1295 = vmatpush2.bf16.xpose.msra.mxu0 0
      %1296 = vmatprep.mubr.bf16.mxu0 0
      %1297 = vmatmul.mubr.bf16.gmra.mxu0 %v1259
      %v1298 = vpop.f32.mrf.mxu0
      %v1299 = vadd.f32 0.0, %v1298
      %v1300 = vpop.f32.mrf.mxu0
      %v1301 = vpop.f32.mrf.mxu0
      %v1302 = vpop.f32.mrf.mxu0
      %1303 = vdwg.mxu0
      %vm1304 = vcmask 36864
      %v1305 = vsel %vm1304, %v1299, -inf
      %1306 = vmax.xlane.f32.xlu0 %v1305
      %v1307 = vpop.xlane.xlu0 %1306
      %v1308 = vsub.f32 %v1299, %v1307
      %v1309 = vmul.f32 %v1308, 1.442695
      %v1310 = vpow.pop %v1309
      %v1311 = vsel %vm1304, %v1310, 0.0
      %1312 = vadd.xlane.f32.xlu0 %v1311
      %v1313 = vpop.xlane.xlu0 %1312
      %v1314 = vrcp.pop %v1313
      %v1315 = vmul.f32 %v1310, %v1314
      %v1316 = vpack.c.bf16 %v1315, %v1315
      %vm1317 = vcmask 39936
      %v1319 = vsel %vm1317, %v1316, 0
      %vm1321 = vcmask 1041408
      %vm1322 = vcmask 1042432
      %v1323 = vsel %vm1321, 4294967295, 65535
      %v1324 = vsel %vm1322, %v1323, 0
      %v1326 = vand.u32 %v1256, %v1324
      %1328 = vmatprep.subr.bf16.mxu0 0
      %1329 = vmatpush1.bf16.msra.mxu0 0
      %1330 = vmatprep.subr.bf16.mxu0 0
      %1331 = vmatpush1.bf16.msra.mxu0 0
      %1332 = vmatprep.subr.bf16.mxu0 0
      %1333 = vmatpush1.bf16.msra.mxu0 0
      %1334 = vmatprep.subr.bf16.mxu0 0
      %1335 = vmatpush1.bf16.msra.mxu0 0
      %1336 = vmatprep.subr.bf16.mxu0 0
      %1337 = vmatpush1.bf16.msra.mxu0 0
      %1338 = vmatprep.subr.bf16.mxu0 0
      %1339 = vmatpush1.bf16.msra.mxu0 0
      %1340 = vmatprep.subr.bf16.mxu0 0
      %1341 = vmatpush1.bf16.msra.mxu0 0
      %1342 = vmatprep.subr.bf16.mxu0 0
      %1343 = vmatpush1.bf16.msra.mxu0 %v1326
      %1344 = vmatprep.subr.bf16.mxu0 0
      %1345 = vmatpush2.bf16.msra.mxu0 0
      %1346 = vmatprep.subr.bf16.mxu0 0
      %1347 = vmatpush2.bf16.msra.mxu0 0
      %1348 = vmatprep.subr.bf16.mxu0 0
      %1349 = vmatpush2.bf16.msra.mxu0 0
      %1350 = vmatprep.subr.bf16.mxu0 0
      %1351 = vmatpush2.bf16.msra.mxu0 0
      %1352 = vmatprep.subr.bf16.mxu0 0
      %1353 = vmatpush2.bf16.msra.mxu0 0
      %1354 = vmatprep.subr.bf16.mxu0 0
      %1355 = vmatpush2.bf16.msra.mxu0 0
      %1356 = vmatprep.subr.bf16.mxu0 0
      %1357 = vmatpush2.bf16.msra.mxu0 0
      %1358 = vmatprep.subr.bf16.mxu0 0
      %1359 = vmatpush2.bf16.msra.mxu0 0
      %1360 = vmatprep.mubr.bf16.mxu0 0
      %1361 = vmatmul.mubr.bf16.gmra.mxu0 %v1319
      %v1362 = vpop.f32.mrf.mxu0
      %v1363 = vadd.f32 0.0, %v1362
      %v1364 = vpop.f32.mrf.mxu0
      %v1365 = vpop.f32.mrf.mxu0
      %v1366 = vpop.f32.mrf.mxu0
      %1367 = vdwg.mxu0
      %1369 = vrot.lane.b32.xlu0 %v1128, 120
      %v1370 = vpop.permute.xlu0 %1369
      %1372 = vrot.lane.b32.xlu0 %v1192, 120
      %v1373 = vpop.permute.xlu0 %1372
      %v1375 = vsel %vm1257, %v1370, 0
      %v1378 = vsel %vm1257, %v1373, 0
      %1380 = vmatprep.subr.bf16.mxu0 0
      %1381 = vmatpush1.bf16.xpose.msra.mxu0 0
      %1382 = vmatprep.subr.bf16.mxu0 0
      %1383 = vmatpush1.bf16.xpose.msra.mxu0 0
      %1384 = vmatprep.subr.bf16.mxu0 0
      %1385 = vmatpush1.bf16.xpose.msra.mxu0 0
      %1386 = vmatprep.subr.bf16.mxu0 0
      %1387 = vmatpush1.bf16.xpose.msra.mxu0 0
      %1388 = vmatprep.subr.bf16.mxu0 0
      %1389 = vmatpush1.bf16.xpose.msra.mxu0 0
      %1390 = vmatprep.subr.bf16.mxu0 0
      %1391 = vmatpush1.bf16.xpose.msra.mxu0 0
      %1392 = vmatprep.subr.bf16.mxu0 0
      %1393 = vmatpush1.bf16.xpose.msra.mxu0 0
      %1394 = vmatprep.subr.bf16.mxu0 0
      %1395 = vmatpush1.bf16.xpose.msra.mxu0 %v1378
      %1396 = vmatprep.subr.bf16.mxu0 0
      %1397 = vmatpush2.bf16.xpose.msra.mxu0 0
      %1398 = vmatprep.subr.bf16.mxu0 0
      %1399 = vmatpush2.bf16.xpose.msra.mxu0 0
      %1400 = vmatprep.subr.bf16.mxu0 0
      %1401 = vmatpush2.bf16.xpose.msra.mxu0 0
      %1402 = vmatprep.subr.bf16.mxu0 0
      %1403 = vmatpush2.bf16.xpose.msra.mxu0 0
      %1404 = vmatprep.subr.bf16.mxu0 0
      %1405 = vmatpush2.bf16.xpose.msra.mxu0 0
      %1406 = vmatprep.subr.bf16.mxu0 0
      %1407 = vmatpush2.bf16.xpose.msra.mxu0 0
      %1408 = vmatprep.subr.bf16.mxu0 0
      %1409 = vmatpush2.bf16.xpose.msra.mxu0 0
      %1410 = vmatprep.subr.bf16.mxu0 0
      %1411 = vmatpush2.bf16.xpose.msra.mxu0 0
      %1412 = vmatprep.mubr.bf16.mxu0 0
      %1413 = vmatmul.mubr.bf16.gmra.mxu0 %v1375
      %v1414 = vpop.f32.mrf.mxu0
      %v1415 = vadd.f32 0.0, %v1414
      %v1416 = vpop.f32.mrf.mxu0
      %v1417 = vpop.f32.mrf.mxu0
      %v1418 = vpop.f32.mrf.mxu0
      %1419 = vdwg.mxu0
      %v1420 = vsel %vm1304, %v1415, -inf
      %1421 = vmax.xlane.f32.xlu0 %v1420
      %v1422 = vpop.xlane.xlu0 %1421
      %v1423 = vsub.f32 %v1415, %v1422
      %v1424 = vmul.f32 %v1423, 1.442695
      %v1425 = vpow.pop %v1424
      %v1426 = vsel %vm1304, %v1425, 0.0
      %1427 = vadd.xlane.f32.xlu0 %v1426
      %v1428 = vpop.xlane.xlu0 %1427
      %v1429 = vrcp.pop %v1428
      %v1430 = vmul.f32 %v1425, %v1429
      %v1431 = vpack.c.bf16 %v1430, %v1430
      %1433 = vrot.lane.b32.xlu0 %v1256, 120
      %v1434 = vpop.permute.xlu0 %1433
      %v1436 = vsel %vm1317, %v1431, 0
      %v1439 = vand.u32 %v1434, %v1324
      %1441 = vmatprep.subr.bf16.mxu0 0
      %1442 = vmatpush1.bf16.msra.mxu0 0
      %1443 = vmatprep.subr.bf16.mxu0 0
      %1444 = vmatpush1.bf16.msra.mxu0 0
      %1445 = vmatprep.subr.bf16.mxu0 0
      %1446 = vmatpush1.bf16.msra.mxu0 0
      %1447 = vmatprep.subr.bf16.mxu0 0
      %1448 = vmatpush1.bf16.msra.mxu0 0
      %1449 = vmatprep.subr.bf16.mxu0 0
      %1450 = vmatpush1.bf16.msra.mxu0 0
      %1451 = vmatprep.subr.bf16.mxu0 0
      %1452 = vmatpush1.bf16.msra.mxu0 0
      %1453 = vmatprep.subr.bf16.mxu0 0
      %1454 = vmatpush1.bf16.msra.mxu0 0
      %1455 = vmatprep.subr.bf16.mxu0 0
      %1456 = vmatpush1.bf16.msra.mxu0 %v1439
      %1457 = vmatprep.subr.bf16.mxu0 0
      %1458 = vmatpush2.bf16.msra.mxu0 0
      %1459 = vmatprep.subr.bf16.mxu0 0
      %1460 = vmatpush2.bf16.msra.mxu0 0
      %1461 = vmatprep.subr.bf16.mxu0 0
      %1462 = vmatpush2.bf16.msra.mxu0 0
      %1463 = vmatprep.subr.bf16.mxu0 0
      %1464 = vmatpush2.bf16.msra.mxu0 0
      %1465 = vmatprep.subr.bf16.mxu0 0
      %1466 = vmatpush2.bf16.msra.mxu0 0
      %1467 = vmatprep.subr.bf16.mxu0 0
      %1468 = vmatpush2.bf16.msra.mxu0 0
      %1469 = vmatprep.subr.bf16.mxu0 0
      %1470 = vmatpush2.bf16.msra.mxu0 0
      %1471 = vmatprep.subr.bf16.mxu0 0
      %1472 = vmatpush2.bf16.msra.mxu0 0
      %1473 = vmatprep.mubr.bf16.mxu0 0
      %1474 = vmatmul.mubr.bf16.gmra.mxu0 %v1436
      %v1475 = vpop.f32.mrf.mxu0
      %v1476 = vadd.f32 0.0, %v1475
      %v1477 = vpop.f32.mrf.mxu0
      %v1478 = vpop.f32.mrf.mxu0
      %v1479 = vpop.f32.mrf.mxu0
      %1480 = vdwg.mxu0
      %1481 = vrot.lane.b32.xlu0 %v1128, 112
      %v1482 = vpop.permute.xlu0 %1481
      %1483 = vrot.lane.b32.xlu0 %v1192, 112
      %v1484 = vpop.permute.xlu0 %1483
      %v1486 = vsel %vm1257, %v1482, 0
      %v1489 = vsel %vm1257, %v1484, 0
      %1491 = vmatprep.subr.bf16.mxu0 0
      %1492 = vmatpush1.bf16.xpose.msra.mxu0 0
      %1493 = vmatprep.subr.bf16.mxu0 0
      %1494 = vmatpush1.bf16.xpose.msra.mxu0 0
      %1495 = vmatprep.subr.bf16.mxu0 0
      %1496 = vmatpush1.bf16.xpose.msra.mxu0 0
      %1497 = vmatprep.subr.bf16.mxu0 0
      %1498 = vmatpush1.bf16.xpose.msra.mxu0 0
      %1499 = vmatprep.subr.bf16.mxu0 0
      %1500 = vmatpush1.bf16.xpose.msra.mxu0 0
      %1501 = vmatprep.subr.bf16.mxu0 0
      %1502 = vmatpush1.bf16.xpose.msra.mxu0 0
      %1503 = vmatprep.subr.bf16.mxu0 0
      %1504 = vmatpush1.bf16.xpose.msra.mxu0 0
      %1505 = vmatprep.subr.bf16.mxu0 0
      %1506 = vmatpush1.bf16.xpose.msra.mxu0 %v1489
      %1507 = vmatprep.subr.bf16.mxu0 0
      %1508 = vmatpush2.bf16.xpose.msra.mxu0 0
      %1509 = vmatprep.subr.bf16.mxu0 0
      %1510 = vmatpush2.bf16.xpose.msra.mxu0 0
      %1511 = vmatprep.subr.bf16.mxu0 0
      %1512 = vmatpush2.bf16.xpose.msra.mxu0 0
      %1513 = vmatprep.subr.bf16.mxu0 0
      %1514 = vmatpush2.bf16.xpose.msra.mxu0 0
      %1515 = vmatprep.subr.bf16.mxu0 0
      %1516 = vmatpush2.bf16.xpose.msra.mxu0 0
      %1517 = vmatprep.subr.bf16.mxu0 0
      %1518 = vmatpush2.bf16.xpose.msra.mxu0 0
      %1519 = vmatprep.subr.bf16.mxu0 0
      %1520 = vmatpush2.bf16.xpose.msra.mxu0 0
      %1521 = vmatprep.subr.bf16.mxu0 0
      %1522 = vmatpush2.bf16.xpose.msra.mxu0 0
      %1523 = vmatprep.mubr.bf16.mxu0 0
      %1524 = vmatmul.mubr.bf16.gmra.mxu0 %v1486
      %v1525 = vpop.f32.mrf.mxu0
      %v1526 = vadd.f32 0.0, %v1525
      %v1527 = vpop.f32.mrf.mxu0
      %v1528 = vpop.f32.mrf.mxu0
      %v1529 = vpop.f32.mrf.mxu0
      %1530 = vdwg.mxu0
      %v1531 = vsel %vm1304, %v1526, -inf
      %1532 = vmax.xlane.f32.xlu0 %v1531
      %v1533 = vpop.xlane.xlu0 %1532
      %v1534 = vsub.f32 %v1526, %v1533
      %v1535 = vmul.f32 %v1534, 1.442695
      %v1536 = vpow.pop %v1535
      %v1537 = vsel %vm1304, %v1536, 0.0
      %1538 = vadd.xlane.f32.xlu0 %v1537
      %v1539 = vpop.xlane.xlu0 %1538
      %v1540 = vrcp.pop %v1539
      %v1541 = vmul.f32 %v1536, %v1540
      %v1542 = vpack.c.bf16 %v1541, %v1541
      %1543 = vrot.lane.b32.xlu0 %v1256, 112
      %v1544 = vpop.permute.xlu0 %1543
      %v1546 = vsel %vm1317, %v1542, 0
      %v1549 = vand.u32 %v1544, %v1324
      %1551 = vmatprep.subr.bf16.mxu0 0
      %1552 = vmatpush1.bf16.msra.mxu0 0
      %1553 = vmatprep.subr.bf16.mxu0 0
      %1554 = vmatpush1.bf16.msra.mxu0 0
      %1555 = vmatprep.subr.bf16.mxu0 0
      %1556 = vmatpush1.bf16.msra.mxu0 0
      %1557 = vmatprep.subr.bf16.mxu0 0
      %1558 = vmatpush1.bf16.msra.mxu0 0
      %1559 = vmatprep.subr.bf16.mxu0 0
      %1560 = vmatpush1.bf16.msra.mxu0 0
      %1561 = vmatprep.subr.bf16.mxu0 0
      %1562 = vmatpush1.bf16.msra.mxu0 0
      %1563 = vmatprep.subr.bf16.mxu0 0
      %1564 = vmatpush1.bf16.msra.mxu0 0
      %1565 = vmatprep.subr.bf16.mxu0 0
      %1566 = vmatpush1.bf16.msra.mxu0 %v1549
      %1567 = vmatprep.subr.bf16.mxu0 0
      %1568 = vmatpush2.bf16.msra.mxu0 0
      %1569 = vmatprep.subr.bf16.mxu0 0
      %1570 = vmatpush2.bf16.msra.mxu0 0
      %1571 = vmatprep.subr.bf16.mxu0 0
      %1572 = vmatpush2.bf16.msra.mxu0 0
      %1573 = vmatprep.subr.bf16.mxu0 0
      %1574 = vmatpush2.bf16.msra.mxu0 0
      %1575 = vmatprep.subr.bf16.mxu0 0
      %1576 = vmatpush2.bf16.msra.mxu0 0
      %1577 = vmatprep.subr.bf16.mxu0 0
      %1578 = vmatpush2.bf16.msra.mxu0 0
      %1579 = vmatprep.subr.bf16.mxu0 0
      %1580 = vmatpush2.bf16.msra.mxu0 0
      %1581 = vmatprep.subr.bf16.mxu0 0
      %1582 = vmatpush2.bf16.msra.mxu0 0
      %1583 = vmatprep.mubr.bf16.mxu0 0
      %1584 = vmatmul.mubr.bf16.gmra.mxu0 %v1546
      %v1585 = vpop.f32.mrf.mxu0
      %v1586 = vadd.f32 0.0, %v1585
      %v1587 = vpop.f32.mrf.mxu0
      %v1588 = vpop.f32.mrf.mxu0
      %v1589 = vpop.f32.mrf.mxu0
      %1590 = vdwg.mxu0
      %1591 = vrot.lane.b32.xlu0 %v1128, 104
      %v1592 = vpop.permute.xlu0 %1591
      %1593 = vrot.lane.b32.xlu0 %v1192, 104
      %v1594 = vpop.permute.xlu0 %1593
      %v1596 = vsel %vm1257, %v1592, 0
      %v1599 = vsel %vm1257, %v1594, 0
      %1601 = vmatprep.subr.bf16.mxu0 0
      %1602 = vmatpush1.bf16.xpose.msra.mxu0 0
      %1603 = vmatprep.subr.bf16.mxu0 0
      %1604 = vmatpush1.bf16.xpose.msra.mxu0 0
      %1605 = vmatprep.subr.bf16.mxu0 0
      %1606 = vmatpush1.bf16.xpose.msra.mxu0 0
      %1607 = vmatprep.subr.bf16.mxu0 0
      %1608 = vmatpush1.bf16.xpose.msra.mxu0 0
      %1609 = vmatprep.subr.bf16.mxu0 0
      %1610 = vmatpush1.bf16.xpose.msra.mxu0 0
      %1611 = vmatprep.subr.bf16.mxu0 0
      %1612 = vmatpush1.bf16.xpose.msra.mxu0 0
      %1613 = vmatprep.subr.bf16.mxu0 0
      %1614 = vmatpush1.bf16.xpose.msra.mxu0 0
      %1615 = vmatprep.subr.bf16.mxu0 0
      %1616 = vmatpush1.bf16.xpose.msra.mxu0 %v1599
      %1617 = vmatprep.subr.bf16.mxu0 0
      %1618 = vmatpush2.bf16.xpose.msra.mxu0 0
      %1619 = vmatprep.subr.bf16.mxu0 0
      %1620 = vmatpush2.bf16.xpose.msra.mxu0 0
      %1621 = vmatprep.subr.bf16.mxu0 0
      %1622 = vmatpush2.bf16.xpose.msra.mxu0 0
      %1623 = vmatprep.subr.bf16.mxu0 0
      %1624 = vmatpush2.bf16.xpose.msra.mxu0 0
      %1625 = vmatprep.subr.bf16.mxu0 0
      %1626 = vmatpush2.bf16.xpose.msra.mxu0 0
      %1627 = vmatprep.subr.bf16.mxu0 0
      %1628 = vmatpush2.bf16.xpose.msra.mxu0 0
      %1629 = vmatprep.subr.bf16.mxu0 0
      %1630 = vmatpush2.bf16.xpose.msra.mxu0 0
      %1631 = vmatprep.subr.bf16.mxu0 0
      %1632 = vmatpush2.bf16.xpose.msra.mxu0 0
      %1633 = vmatprep.mubr.bf16.mxu0 0
      %1634 = vmatmul.mubr.bf16.gmra.mxu0 %v1596
      %v1635 = vpop.f32.mrf.mxu0
      %v1636 = vadd.f32 0.0, %v1635
      %v1637 = vpop.f32.mrf.mxu0
      %v1638 = vpop.f32.mrf.mxu0
      %v1639 = vpop.f32.mrf.mxu0
      %1640 = vdwg.mxu0
      %v1641 = vsel %vm1304, %v1636, -inf
      %1642 = vmax.xlane.f32.xlu0 %v1641
      %v1643 = vpop.xlane.xlu0 %1642
      %v1644 = vsub.f32 %v1636, %v1643
      %v1645 = vmul.f32 %v1644, 1.442695
      %v1646 = vpow.pop %v1645
      %v1647 = vsel %vm1304, %v1646, 0.0
      %1648 = vadd.xlane.f32.xlu0 %v1647
      %v1649 = vpop.xlane.xlu0 %1648
      %v1650 = vrcp.pop %v1649
      %v1651 = vmul.f32 %v1646, %v1650
      %v1652 = vpack.c.bf16 %v1651, %v1651
      %1653 = vrot.lane.b32.xlu0 %v1256, 104
      %v1654 = vpop.permute.xlu0 %1653
      %v1656 = vsel %vm1317, %v1652, 0
      %v1659 = vand.u32 %v1654, %v1324
      %1661 = vmatprep.subr.bf16.mxu0 0
      %1662 = vmatpush1.bf16.msra.mxu0 0
      %1663 = vmatprep.subr.bf16.mxu0 0
      %1664 = vmatpush1.bf16.msra.mxu0 0
      %1665 = vmatprep.subr.bf16.mxu0 0
      %1666 = vmatpush1.bf16.msra.mxu0 0
      %1667 = vmatprep.subr.bf16.mxu0 0
      %1668 = vmatpush1.bf16.msra.mxu0 0
      %1669 = vmatprep.subr.bf16.mxu0 0
      %1670 = vmatpush1.bf16.msra.mxu0 0
      %1671 = vmatprep.subr.bf16.mxu0 0
      %1672 = vmatpush1.bf16.msra.mxu0 0
      %1673 = vmatprep.subr.bf16.mxu0 0
      %1674 = vmatpush1.bf16.msra.mxu0 0
      %1675 = vmatprep.subr.bf16.mxu0 0
      %1676 = vmatpush1.bf16.msra.mxu0 %v1659
      %1677 = vmatprep.subr.bf16.mxu0 0
      %1678 = vmatpush2.bf16.msra.mxu0 0
      %1679 = vmatprep.subr.bf16.mxu0 0
      %1680 = vmatpush2.bf16.msra.mxu0 0
      %1681 = vmatprep.subr.bf16.mxu0 0
      %1682 = vmatpush2.bf16.msra.mxu0 0
      %1683 = vmatprep.subr.bf16.mxu0 0
      %1684 = vmatpush2.bf16.msra.mxu0 0
      %1685 = vmatprep.subr.bf16.mxu0 0
      %1686 = vmatpush2.bf16.msra.mxu0 0
      %1687 = vmatprep.subr.bf16.mxu0 0
      %1688 = vmatpush2.bf16.msra.mxu0 0
      %1689 = vmatprep.subr.bf16.mxu0 0
      %1690 = vmatpush2.bf16.msra.mxu0 0
      %1691 = vmatprep.subr.bf16.mxu0 0
      %1692 = vmatpush2.bf16.msra.mxu0 0
      %1693 = vmatprep.mubr.bf16.mxu0 0
      %1694 = vmatmul.mubr.bf16.gmra.mxu0 %v1656
      %v1695 = vpop.f32.mrf.mxu0
      %v1696 = vadd.f32 0.0, %v1695
      %v1697 = vpop.f32.mrf.mxu0
      %v1698 = vpop.f32.mrf.mxu0
      %v1699 = vpop.f32.mrf.mxu0
      %1700 = vdwg.mxu0
      %1702 = vrot.lane.b32.xlu0 %v1476, 8
      %v1703 = vpop.permute.xlu0 %1702
      %1706 = vrot.lane.b32.xlu0 %v1586, 16
      %v1707 = vpop.permute.xlu0 %1706
      %1710 = vrot.lane.b32.xlu0 %v1696, 24
      %v1711 = vpop.permute.xlu0 %1710
      %v1713 = vsel %vm1257, %v1363, %v1703
      %vm1714 = vcmask 130048
      %v1715 = vsel %vm1714, %v1713, %v1707
      %vm1716 = vcmask 195584
      %v1717 = vsel %vm1716, %v1715, %v1711
      %v1718 = vpack.c.bf16 %v1717, %v1717
      %v1719 = vld [vmem:[%s843] sm:$0xf]
      %v1720 = vld [vmem:[%s843 + $0x4] sm:$0xf]
      %v1721 = vld [vmem:[%s843 + $0x8] sm:$0xf]
      %v1722 = vld [vmem:[%s843 + $0xc] sm:$0xf]
      %v1723 = vld [vmem:[%s846] sm:$0x1]
      %v1725 = vlaneseq
      %v1726 = vshrl.u32 %v1725, 7
      %v1727 = vsub.s32 0, %v1726
      %v1728 = vrot.slane %v1723, %v1727
      %v1734 = vunpack.c.l.b16 %v1719
      %v1735 = vunpack.c.l.b16 %v1720
      %v1736 = vunpack.c.l.b16 %v1721
      %v1737 = vunpack.c.l.b16 %v1722
      %v1738 = vpack.c.b16 %v1735, %v1734
      %v1739 = vpack.c.b16 %v1737, %v1736
      %v1743 = vsel %vm1084, %v1718, 0
      %1745 = vmatprep.subr.bf16.mxu0 0
      %1746 = vmatpush1.bf16.msra.mxu0 0
      %1747 = vmatprep.subr.bf16.mxu0 0
      %1748 = vmatpush1.bf16.msra.mxu0 0
      %1749 = vmatprep.subr.bf16.mxu0 0
      %1750 = vmatpush1.bf16.msra.mxu0 0
      %1751 = vmatprep.subr.bf16.mxu0 0
      %1752 = vmatpush1.bf16.msra.mxu0 0
      %1753 = vmatprep.subr.bf16.mxu0 0
      %1754 = vmatpush1.bf16.msra.mxu0 0
      %1755 = vmatprep.subr.bf16.mxu0 0
      %1756 = vmatpush1.bf16.msra.mxu0 0
      %1757 = vmatprep.subr.bf16.mxu0 0
      %1758 = vmatpush1.bf16.msra.mxu0 %v1739
      %1759 = vmatprep.subr.bf16.mxu0 0
      %1760 = vmatpush1.bf16.msra.mxu0 %v1738
      %1761 = vmatprep.subr.bf16.mxu0 0
      %1762 = vmatpush2.bf16.msra.mxu0 0
      %1763 = vmatprep.subr.bf16.mxu0 0
      %1764 = vmatpush2.bf16.msra.mxu0 0
      %1765 = vmatprep.subr.bf16.mxu0 0
      %1766 = vmatpush2.bf16.msra.mxu0 0
      %1767 = vmatprep.subr.bf16.mxu0 0
      %1768 = vmatpush2.bf16.msra.mxu0 0
      %1769 = vmatprep.subr.bf16.mxu0 0
      %1770 = vmatpush2.bf16.msra.mxu0 0
      %1771 = vmatprep.subr.bf16.mxu0 0
      %1772 = vmatpush2.bf16.msra.mxu0 0
      %1773 = vmatprep.subr.bf16.mxu0 0
      %1774 = vmatpush2.bf16.msra.mxu0 0
      %1775 = vmatprep.subr.bf16.mxu0 0
      %1776 = vmatpush2.bf16.msra.mxu0 0
      %1777 = vmatprep.mubr.bf16.mxu0 0
      %1778 = vmatmul.mubr.bf16.gmra.mxu0 %v1743
      %v1779 = vpop.f32.mrf.mxu0
      %v1780 = vadd.f32 %v1728, %v1779
      %v1781 = vpop.f32.mrf.mxu0
      %v1782 = vpop.f32.mrf.mxu0
      %v1783 = vpop.f32.mrf.mxu0
      %1784 = vdwg.mxu0
      %v1785 = vadd.f32 %v1028, %v1780
      %v1786 = vld [vmem:[%s849] sm:$0x1]
      %v1787 = vld [vmem:[%s852] sm:$0x1]
      %v1788 = vsel %vm1031, %v1785, 0.0
      %1789 = vadd.xlane.f32.xlu0 %v1788
      %v1790 = vpop.xlane.xlu0 %1789
      %v1791 = vmul.f32 %v1790, %v1035
      %v1792 = vsub.f32 %v1785, %v1791
      %v1793 = vmul.f32 %v1792, %v1792
      %v1794 = vsel %vm1031, %v1793, 0.0
      %1795 = vadd.xlane.f32.xlu0 %v1794
      %v1796 = vpop.xlane.xlu0 %1795
      %v1797 = vmul.f32 %v1796, %v1035
      %v1798 = vadd.f32 %v1797, 1e-05
      %v1799 = vrsqrt.pop %v1798
      %v1800 = vmul.f32 %v1792, %v1799
      %v1802 = vlaneseq
      %v1803 = vshrl.u32 %v1802, 7
      %v1804 = vsub.s32 0, %v1803
      %v1805 = vrot.slane %v1786, %v1804
      %v1807 = vmul.f32 %v1800, %v1805
      %v1809 = vlaneseq
      %v1810 = vshrl.u32 %v1809, 7
      %v1811 = vsub.s32 0, %v1810
      %v1812 = vrot.slane %v1787, %v1811
      %v1814 = vadd.f32 %v1807, %v1812
      %v1815 = vpack.c.bf16 %v1814, %v1814
      %v1816 = vld [vmem:[%s857] sm:$0xf]
      %v1817 = vld [vmem:[%s857 + $0x4] sm:$0xf]
      %v1818 = vld [vmem:[%s857 + $0x8] sm:$0xf]
      %v1819 = vld [vmem:[%s857 + $0xc] sm:$0xf]
      %v1820 = vld [vmem:[%s860] sm:$0x1]
      %v1822 = vlaneseq
      %v1823 = vshrl.u32 %v1822, 7
      %v1824 = vsub.s32 0, %v1823
      %v1825 = vrot.slane %v1820, %v1824
      %v1831 = vunpack.c.l.b16 %v1816
      %v1832 = vunpack.c.l.b16 %v1817
      %v1833 = vunpack.c.l.b16 %v1818
      %v1834 = vunpack.c.l.b16 %v1819
      %v1835 = vpack.c.b16 %v1832, %v1831
      %v1836 = vpack.c.b16 %v1834, %v1833
      %v1840 = vsel %vm1084, %v1815, 0
      %1842 = vmatprep.subr.bf16.mxu0 0
      %1843 = vmatpush1.bf16.msra.mxu0 0
      %1844 = vmatprep.subr.bf16.mxu0 0
      %1845 = vmatpush1.bf16.msra.mxu0 0
      %1846 = vmatprep.subr.bf16.mxu0 0
      %1847 = vmatpush1.bf16.msra.mxu0 0
      %1848 = vmatprep.subr.bf16.mxu0 0
      %1849 = vmatpush1.bf16.msra.mxu0 0
      %1850 = vmatprep.subr.bf16.mxu0 0
      %1851 = vmatpush1.bf16.msra.mxu0 0
      %1852 = vmatprep.subr.bf16.mxu0 0
      %1853 = vmatpush1.bf16.msra.mxu0 0
      %1854 = vmatprep.subr.bf16.mxu0 0
      %1855 = vmatpush1.bf16.msra.mxu0 %v1836
      %1856 = vmatprep.subr.bf16.mxu0 0
      %1857 = vmatpush1.bf16.msra.mxu0 %v1835
      %1858 = vmatprep.subr.bf16.mxu0 0
      %1859 = vmatpush2.bf16.msra.mxu0 0
      %1860 = vmatprep.subr.bf16.mxu0 0
      %1861 = vmatpush2.bf16.msra.mxu0 0
      %1862 = vmatprep.subr.bf16.mxu0 0
      %1863 = vmatpush2.bf16.msra.mxu0 0
      %1864 = vmatprep.subr.bf16.mxu0 0
      %1865 = vmatpush2.bf16.msra.mxu0 0
      %1866 = vmatprep.subr.bf16.mxu0 0
      %1867 = vmatpush2.bf16.msra.mxu0 0
      %1868 = vmatprep.subr.bf16.mxu0 0
      %1869 = vmatpush2.bf16.msra.mxu0 0
      %1870 = vmatprep.subr.bf16.mxu0 0
      %1871 = vmatpush2.bf16.msra.mxu0 0
      %1872 = vmatprep.subr.bf16.mxu0 0
      %1873 = vmatpush2.bf16.msra.mxu0 0
      %1874 = vmatprep.mubr.bf16.mxu0 0
      %1875 = vmatmul.mubr.bf16.gmra.mxu0 %v1840
      %v1876 = vpop.f32.mrf.mxu0
      %v1877 = vadd.f32 %v1825, %v1876
      %v1878 = vpop.f32.mrf.mxu0
      %v1879 = vpop.f32.mrf.mxu0
      %v1880 = vpop.f32.mrf.mxu0
      %1881 = vdwg.mxu0
      %v1882 = vmul.f32 %v1877, 1.702
      %v1883 = vxor.u32 %v1882, 2147483648
      %v1884 = vmul.f32 %v1883, 1.442695
      %v1885 = vpow.pop %v1884
      %v1886 = vadd.f32 %v1885, 1.0
      %v1887 = vrcp.pop %v1886
      %v1888 = vmul.f32 1.0, %v1887
      %v1889 = vmul.f32 %v1877, %v1888
      %v1890 = vpack.c.bf16 %v1889, %v1889
      %v1891 = vld [vmem:[%s865] sm:$0xf]
      %v1892 = vld [vmem:[%s865 + $0x4] sm:$0xf]
      %v1893 = vld [vmem:[%s865 + $0x8] sm:$0xf]
      %v1894 = vld [vmem:[%s865 + $0xc] sm:$0xf]
      %v1895 = vld [vmem:[%s865 + $0x10] sm:$0xf]
      %v1896 = vld [vmem:[%s865 + $0x14] sm:$0xf]
      %v1897 = vld [vmem:[%s865 + $0x18] sm:$0xf]
      %v1898 = vld [vmem:[%s865 + $0x1c] sm:$0xf]
      %v1899 = vld [vmem:[%s865 + $0x20] sm:$0xf]
      %v1900 = vld [vmem:[%s865 + $0x24] sm:$0xf]
      %v1901 = vld [vmem:[%s865 + $0x28] sm:$0xf]
      %v1902 = vld [vmem:[%s865 + $0x2c] sm:$0xf]
      %v1903 = vld [vmem:[%s865 + $0x30] sm:$0xf]
      %v1904 = vld [vmem:[%s865 + $0x34] sm:$0xf]
      %v1905 = vld [vmem:[%s865 + $0x38] sm:$0xf]
      %v1906 = vld [vmem:[%s865 + $0x3c] sm:$0xf]
      %v1907 = vld [vmem:[%s868] sm:$0x1]
      %v1909 = vlaneseq
      %v1910 = vshrl.u32 %v1909, 7
      %v1911 = vsub.s32 0, %v1910
      %v1912 = vrot.slane %v1907, %v1911
      %v1930 = vunpack.c.l.b16 %v1891
      %v1931 = vunpack.c.l.b16 %v1892
      %v1932 = vunpack.c.l.b16 %v1893
      %v1933 = vunpack.c.l.b16 %v1894
      %v1934 = vunpack.c.l.b16 %v1895
      %v1935 = vunpack.c.l.b16 %v1896
      %v1936 = vunpack.c.l.b16 %v1897
      %v1937 = vunpack.c.l.b16 %v1898
      %v1938 = vunpack.c.l.b16 %v1899
      %v1939 = vunpack.c.l.b16 %v1900
      %v1940 = vunpack.c.l.b16 %v1901
      %v1941 = vunpack.c.l.b16 %v1902
      %v1942 = vunpack.c.l.b16 %v1903
      %v1943 = vunpack.c.l.b16 %v1904
      %v1944 = vunpack.c.l.b16 %v1905
      %v1945 = vunpack.c.l.b16 %v1906
      %v1946 = vpack.c.b16 %v1931, %v1930
      %v1947 = vpack.c.b16 %v1933, %v1932
      %v1948 = vpack.c.b16 %v1935, %v1934
      %v1949 = vpack.c.b16 %v1937, %v1936
      %v1950 = vpack.c.b16 %v1939, %v1938
      %v1951 = vpack.c.b16 %v1941, %v1940
      %v1952 = vpack.c.b16 %v1943, %v1942
      %v1953 = vpack.c.b16 %v1945, %v1944
      %1962 = vmatprep.subr.bf16.mxu0 0
      %1963 = vmatpush1.bf16.msra.mxu0 %v1953
      %1964 = vmatprep.subr.bf16.mxu0 0
      %1965 = vmatpush1.bf16.msra.mxu0 %v1952
      %1966 = vmatprep.subr.bf16.mxu0 0
      %1967 = vmatpush1.bf16.msra.mxu0 %v1951
      %1968 = vmatprep.subr.bf16.mxu0 0
      %1969 = vmatpush1.bf16.msra.mxu0 %v1950
      %1970 = vmatprep.subr.bf16.mxu0 0
      %1971 = vmatpush1.bf16.msra.mxu0 %v1949
      %1972 = vmatprep.subr.bf16.mxu0 0
      %1973 = vmatpush1.bf16.msra.mxu0 %v1948
      %1974 = vmatprep.subr.bf16.mxu0 0
      %1975 = vmatpush1.bf16.msra.mxu0 %v1947
      %1976 = vmatprep.subr.bf16.mxu0 0
      %1977 = vmatpush1.bf16.msra.mxu0 %v1946
      %1978 = vmatprep.subr.bf16.mxu0 0
      %1979 = vmatpush2.bf16.msra.mxu0 0
      %1980 = vmatprep.subr.bf16.mxu0 0
      %1981 = vmatpush2.bf16.msra.mxu0 0
      %1982 = vmatprep.subr.bf16.mxu0 0
      %1983 = vmatpush2.bf16.msra.mxu0 0
      %1984 = vmatprep.subr.bf16.mxu0 0
      %1985 = vmatpush2.bf16.msra.mxu0 0
      %1986 = vmatprep.subr.bf16.mxu0 0
      %1987 = vmatpush2.bf16.msra.mxu0 0
      %1988 = vmatprep.subr.bf16.mxu0 0
      %1989 = vmatpush2.bf16.msra.mxu0 0
      %1990 = vmatprep.subr.bf16.mxu0 0
      %1991 = vmatpush2.bf16.msra.mxu0 0
      %1992 = vmatprep.subr.bf16.mxu0 0
      %1993 = vmatpush2.bf16.msra.mxu0 0
      %1994 = vmatprep.mubr.bf16.mxu0 0
      %1995 = vmatmul.mubr.bf16.gmra.mxu0 %v1890
      %v1996 = vpop.f32.mrf.mxu0
      %v1997 = vadd.f32 %v1912, %v1996
      %v1998 = vpop.f32.mrf.mxu0
      %v1999 = vpop.f32.mrf.mxu0
      %v2000 = vpop.f32.mrf.mxu0
      %2001 = vdwg.mxu0
      %v2002 = vadd.f32 %v1785, %v1997
      %2003 = vst.msk [vmem:[%s872] sm:$0x1f] %vm1031, %v2002
      %p2004 = scmp.lt.s32.totalorder %s34, 1
      %s2005 = scalar_select %p2004, %s34, 1
      %s2006 = smul.addr %s2005, 8
      %s2007 = scalar_lea.vmem %s19, %s2006
      // Predicated region
      $region101: #{vision_transformer_2d.1} parent=95 // pred_check
        %p2008 = pneg %p544
      $region102: #{vision_transformer_2d.1} parent=95 // pred_check_branch
        %2010 = sbr.rel (%p2008) target = $region104
      $region103: #{vision_transformer_2d.1} parent=95 // pred_region
        _
      $region104: #{vision_transformer_2d.1} parent=95 // pred_fallthru
        _
    $region96: #{vision_transformer_2d.1} parent=5 // pred_fallthru
      _
    %p2011 = scmp.le.s32.totalorder 2, %s25
    // Predicated region
    $region105: #{vision_transformer_2d.1} parent=5 // pred_check
      %p2012 = pneg %p2011
    $region106: #{vision_transformer_2d.1} parent=5 // pred_check_branch
      %2014 = sbr.rel (%p2012) target = $region108
    $region107: #{vision_transformer_2d.1} parent=5 // pred_region
      %s2015 = ssub.s32 %s25, 2
      // Predicated region
      $region109: #{vision_transformer_2d.1} parent=107 // pred_check
        %p2016 = pneg %p550
      $region110: #{vision_transformer_2d.1} parent=107 // pred_check_branch
        %2018 = sbr.rel (%p2016) target = $region112
      $region111: #{vision_transformer_2d.1} parent=107 // pred_region
        %p2019 = scmp.lt.s32.totalorder %s36, 1
        %s2020 = scalar_select %p2019, %s36, 1
        %s2021 = smul.addr %s2020, 8
        %s2022 = scalar_lea.vmem %s19, %s2021
      $region112: #{vision_transformer_2d.1} parent=107 // pred_fallthru
        _
    $region108: #{vision_transformer_2d.1} parent=5 // pred_fallthru
      _
  $region6: #{vision_transformer_2d.1} parent=0 // loop_footer
    %s29 = sadd.s32 1, %s25
  $region7: #{vision_transformer_2d.1} parent=0 // loop_footer_branch
    %24 = sbr.rel target = $region3
  $region8: #{vision_transformer_2d.1} parent=0 // loop_exit
    _

</llo_original>
